<compile_context>
chip_gen: v7x
topology: tpu7x:2x2x1
jax: 0.10.0
libtpu: 0.0.40
codegen_flags: <defaults>
</compile_context>

<pallas_src>
import functools

import jax
import jax.numpy as jnp
import numpy as np
from jax.experimental import pallas as pl
from jax.experimental.pallas import tpu as pltpu

IN_DIM = 28 * 28          # 784
H1 = 256
H2 = 128
LATENT = 64
HEAD = 2 * LATENT         # fused mu|logvar head -> 128 lanes


def _round_up(n, m):
    return (n + m - 1) // m * m


def _vae_kernel(
    x_ref, eps_ref,
    w1_ref, b1_ref,        # encoder layer 1: 784 -> 256 (bf16 W, f32 b)
    w2_ref, b2_ref,        # encoder layer 2: 256 -> 128
    wh_ref, bh_ref,        # fused latent head: 128 -> 128  (mu | logvar)
    w3_ref, b3_ref,        # decoder layer 1: 64 -> 128
    w4_ref, b4_ref,        # decoder layer 2: 128 -> 256
    w5_ref, b5_ref,        # decoder layer 3: 256 -> 784
    out_ref, head_ref,
):
    f32 = jnp.float32
    bf16 = jnp.bfloat16

    # ---- encoder: bf16 MXU inputs, f32 accumulation, f32 elementwise ----
    # (elementwise kept in f32 for v5e portability; v6e/v7x could run it bf16)
    x = x_ref[...].astype(bf16)
    h = jnp.dot(x, w1_ref[...], preferred_element_type=f32) + b1_ref[...]
    h = jnp.maximum(h, 0.0)
    h = jnp.dot(h.astype(bf16), w2_ref[...], preferred_element_type=f32) + b2_ref[...]
    h = jnp.maximum(h, 0.0)

    # ---- fused latent heads: single 128-lane matmul, lane-dense f32 store ----
    head = jnp.dot(h.astype(bf16), wh_ref[...], preferred_element_type=f32) + bh_ref[...]
    head_ref[...] = head
    mu = head[:, :LATENT]
    logvar = head[:, LATENT:]

    # ---- reparameterization trick: z = mu + eps * exp(0.5 * logvar) ----
    z = mu + eps_ref[...] * jnp.exp(0.5 * logvar)

    # ---- decoder ----
    d = jnp.dot(z.astype(bf16), w3_ref[...], preferred_element_type=f32) + b3_ref[...]
    d = jnp.maximum(d, 0.0)
    d = jnp.dot(d.astype(bf16), w4_ref[...], preferred_element_type=f32) + b4_ref[...]
    d = jnp.maximum(d, 0.0)
    d = jnp.dot(d.astype(bf16), w5_ref[...], preferred_element_type=f32) + b5_ref[...]

    # ---- sigmoid on the EUP: exp + approx reciprocal; upper clamp only ----
    sig = pl.reciprocal(1.0 + jnp.exp(-d), approx=True)
    out_ref[...] = jnp.minimum(sig, 1.0).astype(out_ref.dtype)


def prepare_params(params):
    """One-time weight prep (outside jit): fuse mu|logvar head, cast weights to bf16."""
    bf16 = jnp.bfloat16
    f32 = jnp.float32
    return {
        "w1": jnp.asarray(params["w1"], bf16), "b1": jnp.asarray(params["b1"], f32),
        "w2": jnp.asarray(params["w2"], bf16), "b2": jnp.asarray(params["b2"], f32),
        "wh": jnp.concatenate([params["wmu"], params["wlv"]], axis=1).astype(bf16),
        "bh": jnp.concatenate([params["bmu"], params["blv"]], axis=1).astype(f32),
        "w3": jnp.asarray(params["w3"], bf16), "b3": jnp.asarray(params["b3"], f32),
        "w4": jnp.asarray(params["w4"], bf16), "b4": jnp.asarray(params["b4"], f32),
        "w5": jnp.asarray(params["w5"], bf16), "b5": jnp.asarray(params["b5"], f32),
    }


@functools.partial(jax.jit, static_argnames=("block_b",))
def vae_forward(x, eps, prep, *, block_b=512):
    """x: (B, 784) f32, eps: (B, 64) f32, prep: output of prepare_params()."""
    B = x.shape[0]
    block_b = max(8, block_b - block_b % 8)

    # ---- batch tiling: big sublane-aligned tiles, but keep grid >= 2 when the
    # batch allows so v7x's two TensorCores both get work ("parallel" axis). ----
    tb = min(block_b, _round_up(B, 8))
    if B >= 16:
        tb = min(tb, _round_up((B + 1) // 2, 8))
    Bp = _round_up(B, tb)

    if Bp != B:
        x = jnp.pad(x, ((0, Bp - B), (0, 0)))
        eps = jnp.pad(eps, ((0, Bp - B), (0, 0)))

    grid = (Bp // tb,)

    def batch_spec(nf):
        return pl.BlockSpec((tb, nf), lambda i: (i, 0))

    def resident_spec(arr):
        # Constant block index -> DMA'd once, stays hot in VMEM across grid steps.
        return pl.BlockSpec(arr.shape, lambda i: (0, 0))

    weights = (prep["w1"], prep["b1"], prep["w2"], prep["b2"],
               prep["wh"], prep["bh"], prep["w3"], prep["b3"],
               prep["w4"], prep["b4"], prep["w5"], prep["b5"])
    inputs = (x, eps) + weights

    in_specs = [batch_spec(IN_DIM), batch_spec(LATENT)] + [
        resident_spec(a) for a in weights
    ]
    out_specs = (batch_spec(IN_DIM), batch_spec(HEAD))
    out_shapes = (
        jax.ShapeDtypeStruct((Bp, IN_DIM), jnp.bfloat16),   # reconstruction (bf16 I/O)
        jax.ShapeDtypeStruct((Bp, HEAD), jnp.float32),       # fused [mu | logvar]
    )

    # Advisory cost estimate so XLA schedules surrounding ops around the call.
    macs_per_row = (IN_DIM * H1 + H1 * H2 + H2 * HEAD
                    + LATENT * H2 + H2 * H1 + H1 * IN_DIM)
    weight_bytes = sum(int(np.prod(a.shape)) * a.dtype.itemsize for a in weights)
    io_bytes = (Bp * IN_DIM * 4 + Bp * LATENT * 4      # x, eps (f32 in)
                + Bp * IN_DIM * 2 + Bp * HEAD * 4)     # recon (bf16), head (f32)
    cost = pl.CostEstimate(
        flops=2 * Bp * macs_per_row,
        transcendentals=Bp * (LATENT + 2 * IN_DIM),
        bytes_accessed=weight_bytes + io_bytes,
    )

    recon, head = pl.pallas_call(
        _vae_kernel,
        grid=grid,
        out_shape=out_shapes,
        in_specs=in_specs,
        out_specs=out_specs,
        compiler_params=pltpu.CompilerParams(
            dimension_semantics=("parallel",),
            vmem_limit_bytes=32 << 20,
        ),
        cost_estimate=cost,
    )(*inputs)

    if Bp != B:
        recon, head = recon[:B], head[:B]
    mu = head[:, :LATENT]
    logvar = head[:, LATENT:]
    return recon, mu, logvar


def vae_reference(x, eps, params):
    """Pure-JAX f32 reference mirroring the PyTorch module."""
    def lin(a, w, b):
        return a @ w + b
    h = jax.nn.relu(lin(x, params["w1"], params["b1"]))
    h = jax.nn.relu(lin(h, params["w2"], params["b2"]))
    mu = lin(h, params["wmu"], params["bmu"])
    logvar = lin(h, params["wlv"], params["blv"])
    z = mu + eps * jnp.exp(0.5 * logvar)
    d = jax.nn.relu(lin(z, params["w3"], params["b3"]))
    d = jax.nn.relu(lin(d, params["w4"], params["b4"]))
    d = lin(d, params["w5"], params["b5"])
    return jax.nn.sigmoid(d), mu, logvar


def init_params(key):
    """Deterministic init mirroring nn.Linear shapes (weights stored as (in, out))."""
    dims = {
        "1": (IN_DIM, H1),
        "2": (H1, H2),
        "mu": (H2, LATENT),
        "lv": (H2, LATENT),
        "3": (LATENT, H2),
        "4": (H2, H1),
        "5": (H1, IN_DIM),
    }
    params = {}
    for name, (fan_in, fan_out) in dims.items():
        key, kw, kb = jax.random.split(key, 3)
        bound = 1.0 / jnp.sqrt(fan_in)
        params[f"w{name}"] = jax.random.uniform(
            kw, (fan_in, fan_out), jnp.float32, -bound, bound)
        params[f"b{name}"] = jax.random.uniform(
            kb, (1, fan_out), jnp.float32, -bound, bound)
    return params


if __name__ == "__main__":
    key = jax.random.PRNGKey(0)
    k_param, k_x, k_eps, k_x2, k_eps2 = jax.random.split(key, 5)

    params = init_params(k_param)
    prep = prepare_params(params)          # one-time weight prep, outside jit

    # --- small correctness run (single tile) ---
    B = 8
    x = jax.random.uniform(k_x, (B, IN_DIM), jnp.float32)       # "pixel" input in [0,1)
    eps = jax.random.normal(k_eps, (B, LATENT), jnp.float32)    # reparameterization noise

    recon, mu, logvar = vae_forward(x, eps, prep)
    jax.block_until_ready((recon, mu, logvar))

    # mirror the torch assert: sigmoid output must lie in [0, 1]
    assert float(jnp.max(recon)) <= 1.0 and float(jnp.min(recon)) >= 0.0, (
        f"Max: {jnp.max(recon)} || Min: {jnp.min(recon)}"
    )
    assert recon.shape == (B, IN_DIM) and mu.shape == (B, LATENT) and logvar.shape == (B, LATENT)

    r_ref, mu_ref, lv_ref = vae_reference(x, eps, params)
    assert float(jnp.max(jnp.abs(recon.astype(jnp.float32) - r_ref))) < 5e-2
    assert float(jnp.max(jnp.abs(mu - mu_ref))) < 5e-2
    assert float(jnp.max(jnp.abs(logvar - lv_ref))) < 5e-2

    # --- multi-tile run (exercises the batch grid + batch padding path) ---
    B2 = 40
    x2 = jax.random.uniform(k_x2, (B2, IN_DIM), jnp.float32)
    eps2 = jax.random.normal(k_eps2, (B2, LATENT), jnp.float32)
    recon2, mu2, lv2 = vae_forward(x2, eps2, prep, block_b=16)   # grid = (3,)
    jax.block_until_ready((recon2, mu2, lv2))
    assert recon2.shape == (B2, IN_DIM) and mu2.shape == (B2, LATENT) and lv2.shape == (B2, LATENT)
    assert float(jnp.max(recon2)) <= 1.0 and float(jnp.min(recon2)) >= 0.0
    r2_ref, mu2_ref, lv2_ref = vae_reference(x2, eps2, params)
    assert float(jnp.max(jnp.abs(recon2.astype(jnp.float32) - r2_ref))) < 5e-2
    assert float(jnp.max(jnp.abs(mu2 - mu2_ref))) < 5e-2
    assert float(jnp.max(jnp.abs(lv2 - lv2_ref))) < 5e-2

    print("KERNEL_OK")
</pallas_src>

<mosaic_0001>
module attributes {stable_mosaic.version = 11 : i64} {
  func.func @_vae_kernel(%arg0: i32, %arg1: memref<8x784xf32, #tpu.memory_space<vmem>>, %arg2: memref<8x64xf32, #tpu.memory_space<vmem>>, %arg3: memref<784x256xbf16, #tpu.memory_space<vmem>>, %arg4: memref<1x256xf32, #tpu.memory_space<vmem>>, %arg5: memref<256x128xbf16, #tpu.memory_space<vmem>>, %arg6: memref<1x128xf32, #tpu.memory_space<vmem>>, %arg7: memref<128x128xbf16, #tpu.memory_space<vmem>>, %arg8: memref<1x128xf32, #tpu.memory_space<vmem>>, %arg9: memref<64x128xbf16, #tpu.memory_space<vmem>>, %arg10: memref<1x128xf32, #tpu.memory_space<vmem>>, %arg11: memref<128x256xbf16, #tpu.memory_space<vmem>>, %arg12: memref<1x256xf32, #tpu.memory_space<vmem>>, %arg13: memref<256x784xbf16, #tpu.memory_space<vmem>>, %arg14: memref<1x784xf32, #tpu.memory_space<vmem>>, %arg15: memref<8x784xbf16, #tpu.memory_space<vmem>>, %arg16: memref<8x128xf32, #tpu.memory_space<vmem>>) attributes {dimension_semantics = [#tpu.dimension_semantics<parallel>], iteration_bounds = array<i64: 1>, scalar_prefetch = 0 : i64, scratch_operands = 0 : i64, tpu.core_type = #tpu.core_type<tc>, window_params = [{transform_indices = @transform_0, window_bounds = array<i64: 8, 784>}, {transform_indices = @transform_1, window_bounds = array<i64: 8, 64>}, {pipeline_mode = #tpu.pipeline_mode<synchronous>, transform_indices = @transform_2, window_bounds = array<i64: 784, 256>}, {pipeline_mode = #tpu.pipeline_mode<synchronous>, transform_indices = @transform_3, window_bounds = array<i64: 1, 256>}, {pipeline_mode = #tpu.pipeline_mode<synchronous>, transform_indices = @transform_4, window_bounds = array<i64: 256, 128>}, {pipeline_mode = #tpu.pipeline_mode<synchronous>, transform_indices = @transform_5, window_bounds = array<i64: 1, 128>}, {pipeline_mode = #tpu.pipeline_mode<synchronous>, transform_indices = @transform_6, window_bounds = array<i64: 128, 128>}, {pipeline_mode = #tpu.pipeline_mode<synchronous>, transform_indices = @transform_7, window_bounds = array<i64: 1, 128>}, {pipeline_mode = #tpu.pipeline_mode<synchronous>, transform_indices = @transform_8, window_bounds = array<i64: 64, 128>}, {pipeline_mode = #tpu.pipeline_mode<synchronous>, transform_indices = @transform_9, window_bounds = array<i64: 1, 128>}, {pipeline_mode = #tpu.pipeline_mode<synchronous>, transform_indices = @transform_10, window_bounds = array<i64: 128, 256>}, {pipeline_mode = #tpu.pipeline_mode<synchronous>, transform_indices = @transform_11, window_bounds = array<i64: 1, 256>}, {pipeline_mode = #tpu.pipeline_mode<synchronous>, transform_indices = @transform_12, window_bounds = array<i64: 256, 784>}, {pipeline_mode = #tpu.pipeline_mode<synchronous>, transform_indices = @transform_13, window_bounds = array<i64: 1, 784>}, {transform_indices = @transform_14, window_bounds = array<i64: 8, 784>}, {transform_indices = @transform_15, window_bounds = array<i64: 8, 128>}]} {
    %c0 = arith.constant 0 : index
    %c0_0 = arith.constant 0 : index
    %0 = vector.load %arg1[%c0, %c0_0] : memref<8x784xf32, #tpu.memory_space<vmem>>, vector<8x784xf32>
    %1 = arith.truncf %0 : vector<8x784xf32> to vector<8x784xbf16>
    %c0_1 = arith.constant 0 : index
    %c0_2 = arith.constant 0 : index
    %2 = vector.load %arg3[%c0_1, %c0_2] : memref<784x256xbf16, #tpu.memory_space<vmem>>, vector<784x256xbf16>
    %cst = arith.constant dense<0.000000e+00> : vector<8x256xf32>
    %3 = tpu.matmul %1, %2, %cst {dimension_numbers = #tpu.dot_dimension_numbers<[1], [0], [0], [1], [0, 0, 1, 1], [], []>} : vector<8x784xbf16>, vector<784x256xbf16>, vector<8x256xf32> -> vector<8x256xf32>
    %c0_3 = arith.constant 0 : index
    %c0_4 = arith.constant 0 : index
    %4 = vector.load %arg4[%c0_3, %c0_4] : memref<1x256xf32, #tpu.memory_space<vmem>>, vector<1x256xf32>
    %5 = vector.broadcast %4 : vector<1x256xf32> to vector<8x256xf32>
    %6 = arith.addf %3, %5 : vector<8x256xf32>
    %cst_5 = arith.constant 0.000000e+00 : f32
    %7 = vector.broadcast %cst_5 : f32 to vector<8x256xf32>
    %8 = arith.maximumf %6, %7 : vector<8x256xf32>
    %9 = arith.truncf %8 : vector<8x256xf32> to vector<8x256xbf16>
    %c0_6 = arith.constant 0 : index
    %c0_7 = arith.constant 0 : index
    %10 = vector.load %arg5[%c0_6, %c0_7] : memref<256x128xbf16, #tpu.memory_space<vmem>>, vector<256x128xbf16>
    %cst_8 = arith.constant dense<0.000000e+00> : vector<8x128xf32>
    %11 = tpu.matmul %9, %10, %cst_8 {dimension_numbers = #tpu.dot_dimension_numbers<[1], [0], [0], [1], [0, 0, 1, 1], [], []>} : vector<8x256xbf16>, vector<256x128xbf16>, vector<8x128xf32> -> vector<8x128xf32>
    %c0_9 = arith.constant 0 : index
    %c0_10 = arith.constant 0 : index
    %12 = vector.load %arg6[%c0_9, %c0_10] : memref<1x128xf32, #tpu.memory_space<vmem>>, vector<1x128xf32>
    %13 = vector.broadcast %12 : vector<1x128xf32> to vector<8x128xf32>
    %14 = arith.addf %11, %13 : vector<8x128xf32>
    %cst_11 = arith.constant 0.000000e+00 : f32
    %15 = vector.broadcast %cst_11 : f32 to vector<8x128xf32>
    %16 = arith.maximumf %14, %15 : vector<8x128xf32>
    %17 = arith.truncf %16 : vector<8x128xf32> to vector<8x128xbf16>
    %c0_12 = arith.constant 0 : index
    %c0_13 = arith.constant 0 : index
    %18 = vector.load %arg7[%c0_12, %c0_13] : memref<128x128xbf16, #tpu.memory_space<vmem>>, vector<128x128xbf16>
    %cst_14 = arith.constant dense<0.000000e+00> : vector<8x128xf32>
    %19 = tpu.matmul %17, %18, %cst_14 {dimension_numbers = #tpu.dot_dimension_numbers<[1], [0], [0], [1], [0, 0, 1, 1], [], []>} : vector<8x128xbf16>, vector<128x128xbf16>, vector<8x128xf32> -> vector<8x128xf32>
    %c0_15 = arith.constant 0 : index
    %c0_16 = arith.constant 0 : index
    %20 = vector.load %arg8[%c0_15, %c0_16] : memref<1x128xf32, #tpu.memory_space<vmem>>, vector<1x128xf32>
    %21 = vector.broadcast %20 : vector<1x128xf32> to vector<8x128xf32>
    %22 = arith.addf %19, %21 : vector<8x128xf32>
    %c0_17 = arith.constant 0 : index
    %c0_18 = arith.constant 0 : index
    %23 = vector.load %arg16[%c0_17, %c0_18] : memref<8x128xf32, #tpu.memory_space<vmem>>, vector<8x128xf32>
    tpu.vector_store %arg16[%c0_17, %c0_18], %22 {strides = array<i32>} : memref<8x128xf32, #tpu.memory_space<vmem>>, vector<8x128xf32>,
    %24 = vector.extract_strided_slice %22 {offsets = [0, 0], sizes = [8, 64], strides = [1, 1]} : vector<8x128xf32> to vector<8x64xf32>
    %25 = vector.extract_strided_slice %22 {offsets = [0, 64], sizes = [8, 64], strides = [1, 1]} : vector<8x128xf32> to vector<8x64xf32>
    %c0_19 = arith.constant 0 : index
    %c0_20 = arith.constant 0 : index
    %26 = vector.load %arg2[%c0_19, %c0_20] : memref<8x64xf32, #tpu.memory_space<vmem>>, vector<8x64xf32>
    %cst_21 = arith.constant 5.000000e-01 : f32
    %27 = vector.broadcast %cst_21 : f32 to vector<8x64xf32>
    %28 = arith.mulf %27, %25 : vector<8x64xf32>
    %29 = math.exp %28 : vector<8x64xf32>
    %30 = arith.mulf %26, %29 : vector<8x64xf32>
    %31 = arith.addf %24, %30 : vector<8x64xf32>
    %32 = arith.truncf %31 : vector<8x64xf32> to vector<8x64xbf16>
    %c0_22 = arith.constant 0 : index
    %c0_23 = arith.constant 0 : index
    %33 = vector.load %arg9[%c0_22, %c0_23] : memref<64x128xbf16, #tpu.memory_space<vmem>>, vector<64x128xbf16>
    %cst_24 = arith.constant dense<0.000000e+00> : vector<8x128xf32>
    %34 = tpu.matmul %32, %33, %cst_24 {dimension_numbers = #tpu.dot_dimension_numbers<[1], [0], [0], [1], [0, 0, 1, 1], [], []>} : vector<8x64xbf16>, vector<64x128xbf16>, vector<8x128xf32> -> vector<8x128xf32>
    %c0_25 = arith.constant 0 : index
    %c0_26 = arith.constant 0 : index
    %35 = vector.load %arg10[%c0_25, %c0_26] : memref<1x128xf32, #tpu.memory_space<vmem>>, vector<1x128xf32>
    %36 = vector.broadcast %35 : vector<1x128xf32> to vector<8x128xf32>
    %37 = arith.addf %34, %36 : vector<8x128xf32>
    %cst_27 = arith.constant 0.000000e+00 : f32
    %38 = vector.broadcast %cst_27 : f32 to vector<8x128xf32>
    %39 = arith.maximumf %37, %38 : vector<8x128xf32>
    %40 = arith.truncf %39 : vector<8x128xf32> to vector<8x128xbf16>
    %c0_28 = arith.constant 0 : index
    %c0_29 = arith.constant 0 : index
    %41 = vector.load %arg11[%c0_28, %c0_29] : memref<128x256xbf16, #tpu.memory_space<vmem>>, vector<128x256xbf16>
    %cst_30 = arith.constant dense<0.000000e+00> : vector<8x256xf32>
    %42 = tpu.matmul %40, %41, %cst_30 {dimension_numbers = #tpu.dot_dimension_numbers<[1], [0], [0], [1], [0, 0, 1, 1], [], []>} : vector<8x128xbf16>, vector<128x256xbf16>, vector<8x256xf32> -> vector<8x256xf32>
    %c0_31 = arith.constant 0 : index
    %c0_32 = arith.constant 0 : index
    %43 = vector.load %arg12[%c0_31, %c0_32] : memref<1x256xf32, #tpu.memory_space<vmem>>, vector<1x256xf32>
    %44 = vector.broadcast %43 : vector<1x256xf32> to vector<8x256xf32>
    %45 = arith.addf %42, %44 : vector<8x256xf32>
    %cst_33 = arith.constant 0.000000e+00 : f32
    %46 = vector.broadcast %cst_33 : f32 to vector<8x256xf32>
    %47 = arith.maximumf %45, %46 : vector<8x256xf32>
    %48 = arith.truncf %47 : vector<8x256xf32> to vector<8x256xbf16>
    %c0_34 = arith.constant 0 : index
    %c0_35 = arith.constant 0 : index
    %49 = vector.load %arg13[%c0_34, %c0_35] : memref<256x784xbf16, #tpu.memory_space<vmem>>, vector<256x784xbf16>
    %cst_36 = arith.constant dense<0.000000e+00> : vector<8x784xf32>
    %50 = tpu.matmul %48, %49, %cst_36 {dimension_numbers = #tpu.dot_dimension_numbers<[1], [0], [0], [1], [0, 0, 1, 1], [], []>} : vector<8x256xbf16>, vector<256x784xbf16>, vector<8x784xf32> -> vector<8x784xf32>
    %c0_37 = arith.constant 0 : index
    %c0_38 = arith.constant 0 : index
    %51 = vector.load %arg14[%c0_37, %c0_38] : memref<1x784xf32, #tpu.memory_space<vmem>>, vector<1x784xf32>
    %52 = vector.broadcast %51 : vector<1x784xf32> to vector<8x784xf32>
    %53 = arith.addf %50, %52 : vector<8x784xf32>
    %cst_39 = arith.constant 0.000000e+00 : f32
    %54 = vector.broadcast %cst_39 : f32 to vector<8x784xf32>
    %55 = arith.subf %54, %53 : vector<8x784xf32>
    %56 = math.exp %55 : vector<8x784xf32>
    %cst_40 = arith.constant 1.000000e+00 : f32
    %57 = vector.broadcast %cst_40 : f32 to vector<8x784xf32>
    %58 = arith.addf %57, %56 : vector<8x784xf32>
    %59 = tpu.reciprocal %58 {approx = true} : vector<8x784xf32> -> vector<8x784xf32>
    %cst_41 = arith.constant 1.000000e+00 : f32
    %60 = vector.broadcast %cst_41 : f32 to vector<8x784xf32>
    %61 = arith.minimumf %59, %60 : vector<8x784xf32>
    %62 = arith.truncf %61 : vector<8x784xf32> to vector<8x784xbf16>
    %c0_42 = arith.constant 0 : index
    %c0_43 = arith.constant 0 : index
    %63 = vector.load %arg15[%c0_42, %c0_43] : memref<8x784xbf16, #tpu.memory_space<vmem>>, vector<8x784xbf16>
    tpu.vector_store %arg15[%c0_42, %c0_43], %62 {strides = array<i32>} : memref<8x784xbf16, #tpu.memory_space<vmem>>, vector<8x784xbf16>,
    return
  }
  func.func @transform_0(%arg0: i32) -> (i32, i32) {
    %c0_i32 = arith.constant 0 : i32
    %c0_i32_0 = arith.constant 0 : i32
    return %arg0, %c0_i32 : i32, i32
  }
  func.func @transform_1(%arg0: i32) -> (i32, i32) {
    %c0_i32 = arith.constant 0 : i32
    %c0_i32_0 = arith.constant 0 : i32
    return %arg0, %c0_i32 : i32, i32
  }
  func.func @transform_2(%arg0: i32) -> (i32, i32) {
    %c0_i32 = arith.constant 0 : i32
    %c0_i32_0 = arith.constant 0 : i32
    %c0_i32_1 = arith.constant 0 : i32
    return %c0_i32, %c0_i32_0 : i32, i32
  }
  func.func @transform_3(%arg0: i32) -> (i32, i32) {
    %c0_i32 = arith.constant 0 : i32
    %c0_i32_0 = arith.constant 0 : i32
    %c0_i32_1 = arith.constant 0 : i32
    return %c0_i32, %c0_i32_0 : i32, i32
  }
  func.func @transform_4(%arg0: i32) -> (i32, i32) {
    %c0_i32 = arith.constant 0 : i32
    %c0_i32_0 = arith.constant 0 : i32
    %c0_i32_1 = arith.constant 0 : i32
    return %c0_i32, %c0_i32_0 : i32, i32
  }
  func.func @transform_5(%arg0: i32) -> (i32, i32) {
    %c0_i32 = arith.constant 0 : i32
    %c0_i32_0 = arith.constant 0 : i32
    %c0_i32_1 = arith.constant 0 : i32
    return %c0_i32, %c0_i32_0 : i32, i32
  }
  func.func @transform_6(%arg0: i32) -> (i32, i32) {
    %c0_i32 = arith.constant 0 : i32
    %c0_i32_0 = arith.constant 0 : i32
    %c0_i32_1 = arith.constant 0 : i32
    return %c0_i32, %c0_i32_0 : i32, i32
  }
  func.func @transform_7(%arg0: i32) -> (i32, i32) {
    %c0_i32 = arith.constant 0 : i32
    %c0_i32_0 = arith.constant 0 : i32
    %c0_i32_1 = arith.constant 0 : i32
    return %c0_i32, %c0_i32_0 : i32, i32
  }
  func.func @transform_8(%arg0: i32) -> (i32, i32) {
    %c0_i32 = arith.constant 0 : i32
    %c0_i32_0 = arith.constant 0 : i32
    %c0_i32_1 = arith.constant 0 : i32
    return %c0_i32, %c0_i32_0 : i32, i32
  }
  func.func @transform_9(%arg0: i32) -> (i32, i32) {
    %c0_i32 = arith.constant 0 : i32
    %c0_i32_0 = arith.constant 0 : i32
    %c0_i32_1 = arith.constant 0 : i32
    return %c0_i32, %c0_i32_0 : i32, i32
  }
  func.func @transform_10(%arg0: i32) -> (i32, i32) {
    %c0_i32 = arith.constant 0 : i32
    %c0_i32_0 = arith.constant 0 : i32
    %c0_i32_1 = arith.constant 0 : i32
    return %c0_i32, %c0_i32_0 : i32, i32
  }
  func.func @transform_11(%arg0: i32) -> (i32, i32) {
    %c0_i32 = arith.constant 0 : i32
    %c0_i32_0 = arith.constant 0 : i32
    %c0_i32_1 = arith.constant 0 : i32
    return %c0_i32, %c0_i32_0 : i32, i32
  }
  func.func @transform_12(%arg0: i32) -> (i32, i32) {
    %c0_i32 = arith.constant 0 : i32
    %c0_i32_0 = arith.constant 0 : i32
    %c0_i32_1 = arith.constant 0 : i32
    return %c0_i32, %c0_i32_0 : i32, i32
  }
  func.func @transform_13(%arg0: i32) -> (i32, i32) {
    %c0_i32 = arith.constant 0 : i32
    %c0_i32_0 = arith.constant 0 : i32
    %c0_i32_1 = arith.constant 0 : i32
    return %c0_i32, %c0_i32_0 : i32, i32
  }
  func.func @transform_14(%arg0: i32) -> (i32, i32) {
    %c0_i32 = arith.constant 0 : i32
    %c0_i32_0 = arith.constant 0 : i32
    return %arg0, %c0_i32 : i32, i32
  }
  func.func @transform_15(%arg0: i32) -> (i32, i32) {
    %c0_i32 = arith.constant 0 : i32
    %c0_i32_0 = arith.constant 0 : i32
    return %arg0, %c0_i32 : i32, i32
  }
}

</mosaic_0001>

<llo_original>
// kernel: vae_forward.1
$region0: #{vae_forward.1}
  #allocation0 [shape = 'u32[]', space=smem, size = 0x4, offset = 0x4, fixed_abs, tag = 'smem constant byte address 0x4 - core index']
  #allocation1 [shape = 'u32[144,128]{1,0:T(1,128)}', space=vmem, size = 0x12000, scoped, tag = 'internal scratch']
  %s0 = inlined_call_operand.vmem [shape: f32[8,784], index: 0, kind: input, shape index: {}]
  %s1 = inlined_call_operand.vmem [shape: f32[8,64], index: 1, kind: input, shape index: {}]
  %s2 = inlined_call_operand.vmem [shape: bf16[784,256], index: 2, kind: input, shape index: {}]
  %s3 = inlined_call_operand.vmem [shape: f32[1,256], index: 3, kind: input, shape index: {}]
  %s4 = inlined_call_operand.vmem [shape: bf16[256,128], index: 4, kind: input, shape index: {}]
  %s5 = inlined_call_operand.vmem [shape: f32[1,128], index: 5, kind: input, shape index: {}]
  %s6 = inlined_call_operand.vmem [shape: bf16[128,128], index: 6, kind: input, shape index: {}]
  %s7 = inlined_call_operand.vmem [shape: f32[1,128], index: 7, kind: input, shape index: {}]
  %s8 = inlined_call_operand.vmem [shape: bf16[64,128], index: 8, kind: input, shape index: {}]
  %s9 = inlined_call_operand.vmem [shape: f32[1,128], index: 9, kind: input, shape index: {}]
  %s10 = inlined_call_operand.vmem [shape: bf16[128,256], index: 10, kind: input, shape index: {}]
  %s11 = inlined_call_operand.vmem [shape: f32[1,256], index: 11, kind: input, shape index: {}]
  %s12 = inlined_call_operand.vmem [shape: bf16[256,784], index: 12, kind: input, shape index: {}]
  %s13 = inlined_call_operand.vmem [shape: f32[1,784], index: 13, kind: input, shape index: {}]
  %s14 = inlined_call_operand.hbm [shape: bf16[8,784], index: 14, kind: output, shape index: {0}]
  %s15 = inlined_call_operand.vmem [shape: f32[8,128], index: 15, kind: output, shape index: {1}]
  %16 = xla_tuple %s14, %s15
  %s17 = sld [smem:[#allocation0]]
  $region74: #{vae_forward.1} parent=0
    _
  %s19 = ssub.s32 1, %s17
  %s20 = scalar_select 0, %s19, %s17
  $region1: #{vae_forward.1} parent=0
    #allocation2 [shape = 'u8[14336]{0}', space=vmem, size = 0x3800, scoped, tag = 'output window, operand 0, single buffered']
    #allocation3 [shape = 's32[1]{0}', space=sflag, size = 0x4, scoped, tag = 'scoped memory for vae_forward.1']
    %21 = vsyncpa [#allocation3], 0
    // Predicated region
    $region2: #{vae_forward.1} parent=1 // pred_check
      _
    $region3: #{vae_forward.1} parent=1 // pred_check_branch
      %23 = sbr.rel (0) target = $region5
    $region4: #{vae_forward.1} parent=1 // pred_region
      _
    $region5: #{vae_forward.1} parent=1 // pred_fallthru
      _
    // Predicated region
    $region6: #{vae_forward.1} parent=1 // pred_check
      _
    $region7: #{vae_forward.1} parent=1 // pred_check_branch
      %25 = sbr.rel (0) target = $region9
    $region8: #{vae_forward.1} parent=1 // pred_region
      _
    $region9: #{vae_forward.1} parent=1 // pred_fallthru
      _
    // Predicated region
    $region10: #{vae_forward.1} parent=1 // pred_check
      _
    $region11: #{vae_forward.1} parent=1 // pred_check_branch
      %27 = sbr.rel (0) target = $region13
    $region12: #{vae_forward.1} parent=1 // pred_region
      _
    $region13: #{vae_forward.1} parent=1 // pred_fallthru
      _
    // Predicated region
    $region14: #{vae_forward.1} parent=1 // pred_check
      _
    $region15: #{vae_forward.1} parent=1 // pred_check_branch
      %29 = sbr.rel (0) target = $region17
    $region16: #{vae_forward.1} parent=1 // pred_region
      _
    $region17: #{vae_forward.1} parent=1 // pred_fallthru
      _
    // Predicated region
    $region18: #{vae_forward.1} parent=1 // pred_check
      _
    $region19: #{vae_forward.1} parent=1 // pred_check_branch
      %31 = sbr.rel (0) target = $region21
    $region20: #{vae_forward.1} parent=1 // pred_region
      _
    $region21: #{vae_forward.1} parent=1 // pred_fallthru
      _
    // Predicated region
    $region22: #{vae_forward.1} parent=1 // pred_check
      _
    $region23: #{vae_forward.1} parent=1 // pred_check_branch
      %33 = sbr.rel (0) target = $region25
    $region24: #{vae_forward.1} parent=1 // pred_region
      _
    $region25: #{vae_forward.1} parent=1 // pred_fallthru
      _
    // Predicated region
    $region26: #{vae_forward.1} parent=1 // pred_check
      _
    $region27: #{vae_forward.1} parent=1 // pred_check_branch
      %35 = sbr.rel (0) target = $region29
    $region28: #{vae_forward.1} parent=1 // pred_region
      _
    $region29: #{vae_forward.1} parent=1 // pred_fallthru
      _
    // Predicated region
    $region30: #{vae_forward.1} parent=1 // pred_check
      _
    $region31: #{vae_forward.1} parent=1 // pred_check_branch
      %37 = sbr.rel (0) target = $region33
    $region32: #{vae_forward.1} parent=1 // pred_region
      _
    $region33: #{vae_forward.1} parent=1 // pred_fallthru
      _
    // Predicated region
    $region34: #{vae_forward.1} parent=1 // pred_check
      _
    $region35: #{vae_forward.1} parent=1 // pred_check_branch
      %39 = sbr.rel (0) target = $region37
    $region36: #{vae_forward.1} parent=1 // pred_region
      _
    $region37: #{vae_forward.1} parent=1 // pred_fallthru
      _
    // Predicated region
    $region38: #{vae_forward.1} parent=1 // pred_check
      _
    $region39: #{vae_forward.1} parent=1 // pred_check_branch
      %41 = sbr.rel (0) target = $region41
    $region40: #{vae_forward.1} parent=1 // pred_region
      _
    $region41: #{vae_forward.1} parent=1 // pred_fallthru
      _
    // Predicated region
    $region42: #{vae_forward.1} parent=1 // pred_check
      _
    $region43: #{vae_forward.1} parent=1 // pred_check_branch
      %43 = sbr.rel (0) target = $region45
    $region44: #{vae_forward.1} parent=1 // pred_region
      _
    $region45: #{vae_forward.1} parent=1 // pred_fallthru
      _
    // Predicated region
    $region46: #{vae_forward.1} parent=1 // pred_check
      _
    $region47: #{vae_forward.1} parent=1 // pred_check_branch
      %45 = sbr.rel (0) target = $region49
    $region48: #{vae_forward.1} parent=1 // pred_region
      _
    $region49: #{vae_forward.1} parent=1 // pred_fallthru
      _
    // Predicated region
    $region50: #{vae_forward.1} parent=1 // pred_check
      _
    $region51: #{vae_forward.1} parent=1 // pred_check_branch
      %47 = sbr.rel (0) target = $region53
    $region52: #{vae_forward.1} parent=1 // pred_region
      _
    $region53: #{vae_forward.1} parent=1 // pred_fallthru
      _
    // Predicated region
    $region54: #{vae_forward.1} parent=1 // pred_check
      _
    $region55: #{vae_forward.1} parent=1 // pred_check_branch
      %49 = sbr.rel (0) target = $region57
    $region56: #{vae_forward.1} parent=1 // pred_region
      _
    $region57: #{vae_forward.1} parent=1 // pred_fallthru
      _
    %v51 = vld [vmem:[%s0] sm:$0xff]
    %v52 = vld [vmem:[%s0 + $0x8] sm:$0xff]
    %v53 = vld [vmem:[%s0 + $0x10] sm:$0xff]
    %v54 = vld [vmem:[%s0 + $0x18] sm:$0xff]
    %v55 = vld [vmem:[%s0 + $0x20] sm:$0xff]
    %v56 = vld [vmem:[%s0 + $0x28] sm:$0xff]
    %v57 = vld [vmem:[%s0 + $0x30] sm:$0xff]
    %v58 = vpack.c.bf16 %v51, %v51
    %v59 = vpack.c.bf16 %v52, %v52
    %v60 = vpack.c.bf16 %v53, %v53
    %v61 = vpack.c.bf16 %v54, %v54
    %v62 = vpack.c.bf16 %v55, %v55
    %v63 = vpack.c.bf16 %v56, %v56
    %v64 = vpack.c.bf16 %v57, %v57
    %v65 = vld [vmem:[%s2] sm:$0xff]
    %v66 = vld [vmem:[%s2 + $0x8] sm:$0xff]
    %v67 = vld [vmem:[%s2 + $0x10] sm:$0xff]
    %v68 = vld [vmem:[%s2 + $0x18] sm:$0xff]
    %v69 = vld [vmem:[%s2 + $0x20] sm:$0xff]
    %v70 = vld [vmem:[%s2 + $0x28] sm:$0xff]
    %v71 = vld [vmem:[%s2 + $0x30] sm:$0xff]
    %v72 = vld [vmem:[%s2 + $0x38] sm:$0xff]
    %v73 = vld [vmem:[%s2 + $0x40] sm:$0xff]
    %v74 = vld [vmem:[%s2 + $0x48] sm:$0xff]
    %v75 = vld [vmem:[%s2 + $0x50] sm:$0xff]
    %v76 = vld [vmem:[%s2 + $0x58] sm:$0xff]
    %v77 = vld [vmem:[%s2 + $0x60] sm:$0xff]
    %v78 = vld [vmem:[%s2 + $0x68] sm:$0xff]
    %v79 = vld [vmem:[%s2 + $0x70] sm:$0xff]
    %v80 = vld [vmem:[%s2 + $0x78] sm:$0xff]
    %v81 = vld [vmem:[%s2 + $0x80] sm:$0xff]
    %v82 = vld [vmem:[%s2 + $0x88] sm:$0xff]
    %v83 = vld [vmem:[%s2 + $0x90] sm:$0xff]
    %v84 = vld [vmem:[%s2 + $0x98] sm:$0xff]
    %v85 = vld [vmem:[%s2 + $0xa0] sm:$0xff]
    %v86 = vld [vmem:[%s2 + $0xa8] sm:$0xff]
    %v87 = vld [vmem:[%s2 + $0xb0] sm:$0xff]
    %v88 = vld [vmem:[%s2 + $0xb8] sm:$0xff]
    %v89 = vld [vmem:[%s2 + $0xc0] sm:$0xff]
    %v90 = vld [vmem:[%s2 + $0xc8] sm:$0xff]
    %v91 = vld [vmem:[%s2 + $0xd0] sm:$0xff]
    %v92 = vld [vmem:[%s2 + $0xd8] sm:$0xff]
    %v93 = vld [vmem:[%s2 + $0xe0] sm:$0xff]
    %v94 = vld [vmem:[%s2 + $0xe8] sm:$0xff]
    %v95 = vld [vmem:[%s2 + $0xf0] sm:$0xff]
    %v96 = vld [vmem:[%s2 + $0xf8] sm:$0xff]
    %v97 = vld [vmem:[%s2 + $0x100] sm:$0xff]
    %v98 = vld [vmem:[%s2 + $0x108] sm:$0xff]
    %v99 = vld [vmem:[%s2 + $0x110] sm:$0xff]
    %v100 = vld [vmem:[%s2 + $0x118] sm:$0xff]
    %v101 = vld [vmem:[%s2 + $0x120] sm:$0xff]
    %v102 = vld [vmem:[%s2 + $0x128] sm:$0xff]
    %v103 = vld [vmem:[%s2 + $0x130] sm:$0xff]
    %v104 = vld [vmem:[%s2 + $0x138] sm:$0xff]
    %v105 = vld [vmem:[%s2 + $0x140] sm:$0xff]
    %v106 = vld [vmem:[%s2 + $0x148] sm:$0xff]
    %v107 = vld [vmem:[%s2 + $0x150] sm:$0xff]
    %v108 = vld [vmem:[%s2 + $0x158] sm:$0xff]
    %v109 = vld [vmem:[%s2 + $0x160] sm:$0xff]
    %v110 = vld [vmem:[%s2 + $0x168] sm:$0xff]
    %v111 = vld [vmem:[%s2 + $0x170] sm:$0xff]
    %v112 = vld [vmem:[%s2 + $0x178] sm:$0xff]
    %v113 = vld [vmem:[%s2 + $0x180] sm:$0xff]
    %v114 = vld [vmem:[%s2 + $0x188] sm:$0xff]
    %v115 = vld [vmem:[%s2 + $0x190] sm:$0xff]
    %v116 = vld [vmem:[%s2 + $0x198] sm:$0xff]
    %v117 = vld [vmem:[%s2 + $0x1a0] sm:$0xff]
    %v118 = vld [vmem:[%s2 + $0x1a8] sm:$0xff]
    %v119 = vld [vmem:[%s2 + $0x1b0] sm:$0xff]
    %v120 = vld [vmem:[%s2 + $0x1b8] sm:$0xff]
    %v121 = vld [vmem:[%s2 + $0x1c0] sm:$0xff]
    %v122 = vld [vmem:[%s2 + $0x1c8] sm:$0xff]
    %v123 = vld [vmem:[%s2 + $0x1d0] sm:$0xff]
    %v124 = vld [vmem:[%s2 + $0x1d8] sm:$0xff]
    %v125 = vld [vmem:[%s2 + $0x1e0] sm:$0xff]
    %v126 = vld [vmem:[%s2 + $0x1e8] sm:$0xff]
    %v127 = vld [vmem:[%s2 + $0x1f0] sm:$0xff]
    %v128 = vld [vmem:[%s2 + $0x1f8] sm:$0xff]
    %v129 = vld [vmem:[%s2 + $0x200] sm:$0xff]
    %v130 = vld [vmem:[%s2 + $0x208] sm:$0xff]
    %v131 = vld [vmem:[%s2 + $0x210] sm:$0xff]
    %v132 = vld [vmem:[%s2 + $0x218] sm:$0xff]
    %v133 = vld [vmem:[%s2 + $0x220] sm:$0xff]
    %v134 = vld [vmem:[%s2 + $0x228] sm:$0xff]
    %v135 = vld [vmem:[%s2 + $0x230] sm:$0xff]
    %v136 = vld [vmem:[%s2 + $0x238] sm:$0xff]
    %v137 = vld [vmem:[%s2 + $0x240] sm:$0xff]
    %v138 = vld [vmem:[%s2 + $0x248] sm:$0xff]
    %v139 = vld [vmem:[%s2 + $0x250] sm:$0xff]
    %v140 = vld [vmem:[%s2 + $0x258] sm:$0xff]
    %v141 = vld [vmem:[%s2 + $0x260] sm:$0xff]
    %v142 = vld [vmem:[%s2 + $0x268] sm:$0xff]
    %v143 = vld [vmem:[%s2 + $0x270] sm:$0xff]
    %v144 = vld [vmem:[%s2 + $0x278] sm:$0xff]
    %v145 = vld [vmem:[%s2 + $0x280] sm:$0xff]
    %v146 = vld [vmem:[%s2 + $0x288] sm:$0xff]
    %v147 = vld [vmem:[%s2 + $0x290] sm:$0xff]
    %v148 = vld [vmem:[%s2 + $0x298] sm:$0xff]
    %v149 = vld [vmem:[%s2 + $0x2a0] sm:$0xff]
    %v150 = vld [vmem:[%s2 + $0x2a8] sm:$0xff]
    %v151 = vld [vmem:[%s2 + $0x2b0] sm:$0xff]
    %v152 = vld [vmem:[%s2 + $0x2b8] sm:$0xff]
    %v153 = vld [vmem:[%s2 + $0x2c0] sm:$0xff]
    %v154 = vld [vmem:[%s2 + $0x2c8] sm:$0xff]
    %v155 = vld [vmem:[%s2 + $0x2d0] sm:$0xff]
    %v156 = vld [vmem:[%s2 + $0x2d8] sm:$0xff]
    %v157 = vld [vmem:[%s2 + $0x2e0] sm:$0xff]
    %v158 = vld [vmem:[%s2 + $0x2e8] sm:$0xff]
    %v159 = vld [vmem:[%s2 + $0x2f0] sm:$0xff]
    %v160 = vld [vmem:[%s2 + $0x2f8] sm:$0xff]
    %v161 = vld [vmem:[%s2 + $0x300] sm:$0xff]
    %v162 = vld [vmem:[%s2 + $0x308] sm:$0xff]
    %v163 = vld [vmem:[%s3] sm:$0x3]
    %v165 = vlaneseq
    %v166 = vshrl.u32 %v165, 7
    %v167 = vsub.s32 0, %v166
    %v168 = vrot.slane %v163, %v167
    %v169 = vlaneseq
    %v170 = vshrl.u32 %v169, 7
    %v171 = vsub.s32 1, %v170
    %v172 = vrot.slane %v163, %v171
    %v273 = vunpack.c.l.b16 %v65
    %v274 = vunpack.c.h.b16 %v65
    %v275 = vunpack.c.l.b16 %v66
    %v276 = vunpack.c.h.b16 %v66
    %v277 = vunpack.c.l.b16 %v67
    %v278 = vunpack.c.h.b16 %v67
    %v279 = vunpack.c.l.b16 %v68
    %v280 = vunpack.c.h.b16 %v68
    %v281 = vunpack.c.l.b16 %v69
    %v282 = vunpack.c.h.b16 %v69
    %v283 = vunpack.c.l.b16 %v70
    %v284 = vunpack.c.h.b16 %v70
    %v285 = vunpack.c.l.b16 %v71
    %v286 = vunpack.c.h.b16 %v71
    %v287 = vunpack.c.l.b16 %v72
    %v288 = vunpack.c.h.b16 %v72
    %v289 = vunpack.c.l.b16 %v73
    %v290 = vunpack.c.h.b16 %v73
    %v291 = vunpack.c.l.b16 %v74
    %v292 = vunpack.c.h.b16 %v74
    %v293 = vunpack.c.l.b16 %v75
    %v294 = vunpack.c.h.b16 %v75
    %v295 = vunpack.c.l.b16 %v76
    %v296 = vunpack.c.h.b16 %v76
    %v297 = vunpack.c.l.b16 %v77
    %v298 = vunpack.c.h.b16 %v77
    %v299 = vunpack.c.l.b16 %v78
    %v300 = vunpack.c.h.b16 %v78
    %v301 = vunpack.c.l.b16 %v79
    %v302 = vunpack.c.h.b16 %v79
    %v303 = vunpack.c.l.b16 %v80
    %v304 = vunpack.c.h.b16 %v80
    %v305 = vunpack.c.l.b16 %v81
    %v306 = vunpack.c.h.b16 %v81
    %v307 = vunpack.c.l.b16 %v82
    %v308 = vunpack.c.h.b16 %v82
    %v309 = vunpack.c.l.b16 %v83
    %v310 = vunpack.c.h.b16 %v83
    %v311 = vunpack.c.l.b16 %v84
    %v312 = vunpack.c.h.b16 %v84
    %v313 = vunpack.c.l.b16 %v85
    %v314 = vunpack.c.h.b16 %v85
    %v315 = vunpack.c.l.b16 %v86
    %v316 = vunpack.c.h.b16 %v86
    %v317 = vunpack.c.l.b16 %v87
    %v318 = vunpack.c.h.b16 %v87
    %v319 = vunpack.c.l.b16 %v88
    %v320 = vunpack.c.h.b16 %v88
    %v321 = vunpack.c.l.b16 %v89
    %v322 = vunpack.c.h.b16 %v89
    %v323 = vunpack.c.l.b16 %v90
    %v324 = vunpack.c.h.b16 %v90
    %v325 = vunpack.c.l.b16 %v91
    %v326 = vunpack.c.h.b16 %v91
    %v327 = vunpack.c.l.b16 %v92
    %v328 = vunpack.c.h.b16 %v92
    %v329 = vunpack.c.l.b16 %v93
    %v330 = vunpack.c.h.b16 %v93
    %v331 = vunpack.c.l.b16 %v94
    %v332 = vunpack.c.h.b16 %v94
    %v333 = vunpack.c.l.b16 %v95
    %v334 = vunpack.c.h.b16 %v95
    %v335 = vunpack.c.l.b16 %v96
    %v336 = vunpack.c.h.b16 %v96
    %v337 = vunpack.c.l.b16 %v97
    %v338 = vunpack.c.h.b16 %v97
    %v339 = vunpack.c.l.b16 %v98
    %v340 = vunpack.c.h.b16 %v98
    %v341 = vunpack.c.l.b16 %v99
    %v342 = vunpack.c.h.b16 %v99
    %v343 = vunpack.c.l.b16 %v100
    %v344 = vunpack.c.h.b16 %v100
    %v345 = vunpack.c.l.b16 %v101
    %v346 = vunpack.c.h.b16 %v101
    %v347 = vunpack.c.l.b16 %v102
    %v348 = vunpack.c.h.b16 %v102
    %v349 = vunpack.c.l.b16 %v103
    %v350 = vunpack.c.h.b16 %v103
    %v351 = vunpack.c.l.b16 %v104
    %v352 = vunpack.c.h.b16 %v104
    %v353 = vunpack.c.l.b16 %v105
    %v354 = vunpack.c.h.b16 %v105
    %v355 = vunpack.c.l.b16 %v106
    %v356 = vunpack.c.h.b16 %v106
    %v357 = vunpack.c.l.b16 %v107
    %v358 = vunpack.c.h.b16 %v107
    %v359 = vunpack.c.l.b16 %v108
    %v360 = vunpack.c.h.b16 %v108
    %v361 = vunpack.c.l.b16 %v109
    %v362 = vunpack.c.h.b16 %v109
    %v363 = vunpack.c.l.b16 %v110
    %v364 = vunpack.c.h.b16 %v110
    %v365 = vunpack.c.l.b16 %v111
    %v366 = vunpack.c.h.b16 %v111
    %v367 = vunpack.c.l.b16 %v112
    %v368 = vunpack.c.h.b16 %v112
    %v369 = vunpack.c.l.b16 %v113
    %v370 = vunpack.c.h.b16 %v113
    %v371 = vunpack.c.l.b16 %v114
    %v372 = vunpack.c.h.b16 %v114
    %v373 = vunpack.c.l.b16 %v115
    %v374 = vunpack.c.h.b16 %v115
    %v375 = vunpack.c.l.b16 %v116
    %v376 = vunpack.c.h.b16 %v116
    %v377 = vunpack.c.l.b16 %v117
    %v378 = vunpack.c.h.b16 %v117
    %v379 = vunpack.c.l.b16 %v118
    %v380 = vunpack.c.h.b16 %v118
    %v381 = vunpack.c.l.b16 %v119
    %v382 = vunpack.c.h.b16 %v119
    %v383 = vunpack.c.l.b16 %v120
    %v384 = vunpack.c.h.b16 %v120
    %v385 = vunpack.c.l.b16 %v121
    %v386 = vunpack.c.h.b16 %v121
    %v387 = vunpack.c.l.b16 %v122
    %v388 = vunpack.c.h.b16 %v122
    %v389 = vunpack.c.l.b16 %v123
    %v390 = vunpack.c.h.b16 %v123
    %v391 = vunpack.c.l.b16 %v124
    %v392 = vunpack.c.h.b16 %v124
    %v393 = vunpack.c.l.b16 %v125
    %v394 = vunpack.c.h.b16 %v125
    %v395 = vunpack.c.l.b16 %v126
    %v396 = vunpack.c.h.b16 %v126
    %v397 = vunpack.c.l.b16 %v127
    %v398 = vunpack.c.h.b16 %v127
    %v399 = vunpack.c.l.b16 %v128
    %v400 = vunpack.c.h.b16 %v128
    %v401 = vunpack.c.l.b16 %v129
    %v402 = vunpack.c.h.b16 %v129
    %v403 = vunpack.c.l.b16 %v130
    %v404 = vunpack.c.h.b16 %v130
    %v405 = vunpack.c.l.b16 %v131
    %v406 = vunpack.c.h.b16 %v131
    %v407 = vunpack.c.l.b16 %v132
    %v408 = vunpack.c.h.b16 %v132
    %v409 = vunpack.c.l.b16 %v133
    %v410 = vunpack.c.h.b16 %v133
    %v411 = vunpack.c.l.b16 %v134
    %v412 = vunpack.c.h.b16 %v134
    %v413 = vunpack.c.l.b16 %v135
    %v414 = vunpack.c.h.b16 %v135
    %v415 = vunpack.c.l.b16 %v136
    %v416 = vunpack.c.h.b16 %v136
    %v417 = vunpack.c.l.b16 %v137
    %v418 = vunpack.c.h.b16 %v137
    %v419 = vunpack.c.l.b16 %v138
    %v420 = vunpack.c.h.b16 %v138
    %v421 = vunpack.c.l.b16 %v139
    %v422 = vunpack.c.h.b16 %v139
    %v423 = vunpack.c.l.b16 %v140
    %v424 = vunpack.c.h.b16 %v140
    %v425 = vunpack.c.l.b16 %v141
    %v426 = vunpack.c.h.b16 %v141
    %v427 = vunpack.c.l.b16 %v142
    %v428 = vunpack.c.h.b16 %v142
    %v429 = vunpack.c.l.b16 %v143
    %v430 = vunpack.c.h.b16 %v143
    %v431 = vunpack.c.l.b16 %v144
    %v432 = vunpack.c.h.b16 %v144
    %v433 = vunpack.c.l.b16 %v145
    %v434 = vunpack.c.h.b16 %v145
    %v435 = vunpack.c.l.b16 %v146
    %v436 = vunpack.c.h.b16 %v146
    %v437 = vunpack.c.l.b16 %v147
    %v438 = vunpack.c.h.b16 %v147
    %v439 = vunpack.c.l.b16 %v148
    %v440 = vunpack.c.h.b16 %v148
    %v441 = vunpack.c.l.b16 %v149
    %v442 = vunpack.c.h.b16 %v149
    %v443 = vunpack.c.l.b16 %v150
    %v444 = vunpack.c.h.b16 %v150
    %v445 = vunpack.c.l.b16 %v151
    %v446 = vunpack.c.h.b16 %v151
    %v447 = vunpack.c.l.b16 %v152
    %v448 = vunpack.c.h.b16 %v152
    %v449 = vunpack.c.l.b16 %v153
    %v450 = vunpack.c.h.b16 %v153
    %v451 = vunpack.c.l.b16 %v154
    %v452 = vunpack.c.h.b16 %v154
    %v453 = vunpack.c.l.b16 %v155
    %v454 = vunpack.c.h.b16 %v155
    %v455 = vunpack.c.l.b16 %v156
    %v456 = vunpack.c.h.b16 %v156
    %v457 = vunpack.c.l.b16 %v157
    %v458 = vunpack.c.h.b16 %v157
    %v459 = vunpack.c.l.b16 %v158
    %v460 = vunpack.c.h.b16 %v158
    %v461 = vunpack.c.l.b16 %v159
    %v462 = vunpack.c.h.b16 %v159
    %v463 = vunpack.c.l.b16 %v160
    %v464 = vunpack.c.h.b16 %v160
    %v465 = vunpack.c.l.b16 %v161
    %v466 = vunpack.c.h.b16 %v161
    %v467 = vunpack.c.l.b16 %v162
    %v468 = vunpack.c.h.b16 %v162
    %v469 = vpack.c.b16 %v275, %v273
    %v470 = vpack.c.b16 %v276, %v274
    %v471 = vpack.c.b16 %v279, %v277
    %v472 = vpack.c.b16 %v280, %v278
    %v473 = vpack.c.b16 %v283, %v281
    %v474 = vpack.c.b16 %v284, %v282
    %v475 = vpack.c.b16 %v287, %v285
    %v476 = vpack.c.b16 %v288, %v286
    %v477 = vpack.c.b16 %v291, %v289
    %v478 = vpack.c.b16 %v292, %v290
    %v479 = vpack.c.b16 %v295, %v293
    %v480 = vpack.c.b16 %v296, %v294
    %v481 = vpack.c.b16 %v299, %v297
    %v482 = vpack.c.b16 %v300, %v298
    %v483 = vpack.c.b16 %v303, %v301
    %v484 = vpack.c.b16 %v304, %v302
    %v485 = vpack.c.b16 %v307, %v305
    %v486 = vpack.c.b16 %v308, %v306
    %v487 = vpack.c.b16 %v311, %v309
    %v488 = vpack.c.b16 %v312, %v310
    %v489 = vpack.c.b16 %v315, %v313
    %v490 = vpack.c.b16 %v316, %v314
    %v491 = vpack.c.b16 %v319, %v317
    %v492 = vpack.c.b16 %v320, %v318
    %v493 = vpack.c.b16 %v323, %v321
    %v494 = vpack.c.b16 %v324, %v322
    %v495 = vpack.c.b16 %v327, %v325
    %v496 = vpack.c.b16 %v328, %v326
    %v497 = vpack.c.b16 %v331, %v329
    %v498 = vpack.c.b16 %v332, %v330
    %v499 = vpack.c.b16 %v335, %v333
    %v500 = vpack.c.b16 %v336, %v334
    %v501 = vpack.c.b16 %v339, %v337
    %v502 = vpack.c.b16 %v340, %v338
    %v503 = vpack.c.b16 %v343, %v341
    %v504 = vpack.c.b16 %v344, %v342
    %v505 = vpack.c.b16 %v347, %v345
    %v506 = vpack.c.b16 %v348, %v346
    %v507 = vpack.c.b16 %v351, %v349
    %v508 = vpack.c.b16 %v352, %v350
    %v509 = vpack.c.b16 %v355, %v353
    %v510 = vpack.c.b16 %v356, %v354
    %v511 = vpack.c.b16 %v359, %v357
    %v512 = vpack.c.b16 %v360, %v358
    %v513 = vpack.c.b16 %v363, %v361
    %v514 = vpack.c.b16 %v364, %v362
    %v515 = vpack.c.b16 %v367, %v365
    %v516 = vpack.c.b16 %v368, %v366
    %v517 = vpack.c.b16 %v371, %v369
    %v518 = vpack.c.b16 %v372, %v370
    %v519 = vpack.c.b16 %v375, %v373
    %v520 = vpack.c.b16 %v376, %v374
    %v521 = vpack.c.b16 %v379, %v377
    %v522 = vpack.c.b16 %v380, %v378
    %v523 = vpack.c.b16 %v383, %v381
    %v524 = vpack.c.b16 %v384, %v382
    %v525 = vpack.c.b16 %v387, %v385
    %v526 = vpack.c.b16 %v388, %v386
    %v527 = vpack.c.b16 %v391, %v389
    %v528 = vpack.c.b16 %v392, %v390
    %v529 = vpack.c.b16 %v395, %v393
    %v530 = vpack.c.b16 %v396, %v394
    %v531 = vpack.c.b16 %v399, %v397
    %v532 = vpack.c.b16 %v400, %v398
    %v533 = vpack.c.b16 %v403, %v401
    %v534 = vpack.c.b16 %v404, %v402
    %v535 = vpack.c.b16 %v407, %v405
    %v536 = vpack.c.b16 %v408, %v406
    %v537 = vpack.c.b16 %v411, %v409
    %v538 = vpack.c.b16 %v412, %v410
    %v539 = vpack.c.b16 %v415, %v413
    %v540 = vpack.c.b16 %v416, %v414
    %v541 = vpack.c.b16 %v419, %v417
    %v542 = vpack.c.b16 %v420, %v418
    %v543 = vpack.c.b16 %v423, %v421
    %v544 = vpack.c.b16 %v424, %v422
    %v545 = vpack.c.b16 %v427, %v425
    %v546 = vpack.c.b16 %v428, %v426
    %v547 = vpack.c.b16 %v431, %v429
    %v548 = vpack.c.b16 %v432, %v430
    %v549 = vpack.c.b16 %v435, %v433
    %v550 = vpack.c.b16 %v436, %v434
    %v551 = vpack.c.b16 %v439, %v437
    %v552 = vpack.c.b16 %v440, %v438
    %v553 = vpack.c.b16 %v443, %v441
    %v554 = vpack.c.b16 %v444, %v442
    %v555 = vpack.c.b16 %v447, %v445
    %v556 = vpack.c.b16 %v448, %v446
    %v557 = vpack.c.b16 %v451, %v449
    %v558 = vpack.c.b16 %v452, %v450
    %v559 = vpack.c.b16 %v455, %v453
    %v560 = vpack.c.b16 %v456, %v454
    %v561 = vpack.c.b16 %v459, %v457
    %v562 = vpack.c.b16 %v460, %v458
    %v563 = vpack.c.b16 %v463, %v461
    %v564 = vpack.c.b16 %v464, %v462
    %v565 = vpack.c.b16 %v467, %v465
    %v566 = vpack.c.b16 %v468, %v466
    %vm665 = vcmask 130048
    %v667 = vsel %vm665, %v64, 0
    %669 = vmatprep.subr.bf16.mxu0 %v470
    %670 = vmatpush1.bf16.msra.mxu0 %v469
    %671 = vmatprep.subr.bf16.mxu0 %v472
    %672 = vmatpush1.bf16.msra.mxu0 %v471
    %673 = vmatprep.subr.bf16.mxu0 %v474
    %674 = vmatpush1.bf16.msra.mxu0 %v473
    %675 = vmatprep.subr.bf16.mxu0 %v476
    %676 = vmatpush1.bf16.msra.mxu0 %v475
    %677 = vmatprep.subr.bf16.mxu0 %v478
    %678 = vmatpush1.bf16.msra.mxu0 %v477
    %679 = vmatprep.subr.bf16.mxu0 %v480
    %680 = vmatpush1.bf16.msra.mxu0 %v479
    %681 = vmatprep.subr.bf16.mxu0 %v482
    %682 = vmatpush1.bf16.msra.mxu0 %v481
    %683 = vmatprep.subr.bf16.mxu0 %v484
    %684 = vmatpush1.bf16.msra.mxu0 %v483
    %685 = vmatprep.subr.bf16.mxu0 %v486
    %686 = vmatpush1.bf16.msra.mxu0 %v485
    %687 = vmatprep.subr.bf16.mxu0 %v488
    %688 = vmatpush1.bf16.msra.mxu0 %v487
    %689 = vmatprep.subr.bf16.mxu0 %v490
    %690 = vmatpush1.bf16.msra.mxu0 %v489
    %691 = vmatprep.subr.bf16.mxu0 %v492
    %692 = vmatpush1.bf16.msra.mxu0 %v491
    %693 = vmatprep.subr.bf16.mxu0 %v494
    %694 = vmatpush1.bf16.msra.mxu0 %v493
    %695 = vmatprep.subr.bf16.mxu0 %v496
    %696 = vmatpush1.bf16.msra.mxu0 %v495
    %697 = vmatprep.subr.bf16.mxu0 %v498
    %698 = vmatpush1.bf16.msra.mxu0 %v497
    %699 = vmatprep.subr.bf16.mxu0 %v500
    %700 = vmatpush1.bf16.msra.mxu0 %v499
    %701 = vmatprep.mubr.bf16.mxu0 %v59
    %702 = vmatmul.mubr.bf16.gmra.mrb[0].mxu0 %v58
    %v703 = vpop.f32.mrb[0].mxu0
    %v704 = vadd.f32 %v168, %v703
    %v705 = vpop.f32.mrb[0].mxu0
    %v706 = vadd.f32 %v172, %v705
    %v707 = vpop.f32.mrb[0].mxu0
    %v708 = vpop.f32.mrb[0].mxu0
    %709 = vdwg.mxu0
    %710 = vmatprep.subr.bf16.mxu0 %v502
    %711 = vmatpush1.bf16.msra.mxu0 %v501
    %712 = vmatprep.subr.bf16.mxu0 %v504
    %713 = vmatpush1.bf16.msra.mxu0 %v503
    %714 = vmatprep.subr.bf16.mxu0 %v506
    %715 = vmatpush1.bf16.msra.mxu0 %v505
    %716 = vmatprep.subr.bf16.mxu0 %v508
    %717 = vmatpush1.bf16.msra.mxu0 %v507
    %718 = vmatprep.subr.bf16.mxu0 %v510
    %719 = vmatpush1.bf16.msra.mxu0 %v509
    %720 = vmatprep.subr.bf16.mxu0 %v512
    %721 = vmatpush1.bf16.msra.mxu0 %v511
    %722 = vmatprep.subr.bf16.mxu0 %v514
    %723 = vmatpush1.bf16.msra.mxu0 %v513
    %724 = vmatprep.subr.bf16.mxu0 %v516
    %725 = vmatpush1.bf16.msra.mxu0 %v515
    %726 = vmatprep.subr.bf16.mxu0 %v518
    %727 = vmatpush1.bf16.msra.mxu0 %v517
    %728 = vmatprep.subr.bf16.mxu0 %v520
    %729 = vmatpush1.bf16.msra.mxu0 %v519
    %730 = vmatprep.subr.bf16.mxu0 %v522
    %731 = vmatpush1.bf16.msra.mxu0 %v521
    %732 = vmatprep.subr.bf16.mxu0 %v524
    %733 = vmatpush1.bf16.msra.mxu0 %v523
    %734 = vmatprep.subr.bf16.mxu0 %v526
    %735 = vmatpush1.bf16.msra.mxu0 %v525
    %736 = vmatprep.subr.bf16.mxu0 %v528
    %737 = vmatpush1.bf16.msra.mxu0 %v527
    %738 = vmatprep.subr.bf16.mxu0 %v530
    %739 = vmatpush1.bf16.msra.mxu0 %v529
    %740 = vmatprep.subr.bf16.mxu0 %v532
    %741 = vmatpush1.bf16.msra.mxu0 %v531
    %742 = vmatprep.mubr.bf16.mxu0 %v61
    %743 = vmatmul.mubr.bf16.gmra.mrb[0].mxu0 %v60
    %v744 = vpop.f32.mrb[0].mxu0
    %v745 = vadd.f32 %v704, %v744
    %v746 = vpop.f32.mrb[0].mxu0
    %v747 = vadd.f32 %v706, %v746
    %v748 = vpop.f32.mrb[0].mxu0
    %v749 = vpop.f32.mrb[0].mxu0
    %750 = vdwg.mxu0
    %751 = vmatprep.subr.bf16.mxu0 %v534
    %752 = vmatpush1.bf16.msra.mxu0 %v533
    %753 = vmatprep.subr.bf16.mxu0 %v536
    %754 = vmatpush1.bf16.msra.mxu0 %v535
    %755 = vmatprep.subr.bf16.mxu0 %v538
    %756 = vmatpush1.bf16.msra.mxu0 %v537
    %757 = vmatprep.subr.bf16.mxu0 %v540
    %758 = vmatpush1.bf16.msra.mxu0 %v539
    %759 = vmatprep.subr.bf16.mxu0 %v542
    %760 = vmatpush1.bf16.msra.mxu0 %v541
    %761 = vmatprep.subr.bf16.mxu0 %v544
    %762 = vmatpush1.bf16.msra.mxu0 %v543
    %763 = vmatprep.subr.bf16.mxu0 %v546
    %764 = vmatpush1.bf16.msra.mxu0 %v545
    %765 = vmatprep.subr.bf16.mxu0 %v548
    %766 = vmatpush1.bf16.msra.mxu0 %v547
    %767 = vmatprep.subr.bf16.mxu0 %v550
    %768 = vmatpush1.bf16.msra.mxu0 %v549
    %769 = vmatprep.subr.bf16.mxu0 %v552
    %770 = vmatpush1.bf16.msra.mxu0 %v551
    %771 = vmatprep.subr.bf16.mxu0 %v554
    %772 = vmatpush1.bf16.msra.mxu0 %v553
    %773 = vmatprep.subr.bf16.mxu0 %v556
    %774 = vmatpush1.bf16.msra.mxu0 %v555
    %775 = vmatprep.subr.bf16.mxu0 %v558
    %776 = vmatpush1.bf16.msra.mxu0 %v557
    %777 = vmatprep.subr.bf16.mxu0 %v560
    %778 = vmatpush1.bf16.msra.mxu0 %v559
    %779 = vmatprep.subr.bf16.mxu0 %v562
    %780 = vmatpush1.bf16.msra.mxu0 %v561
    %781 = vmatprep.subr.bf16.mxu0 %v564
    %782 = vmatpush1.bf16.msra.mxu0 %v563
    %783 = vmatprep.mubr.bf16.mxu0 %v63
    %784 = vmatmul.mubr.bf16.gmra.mrb[0].mxu0 %v62
    %v785 = vpop.f32.mrb[0].mxu0
    %v786 = vadd.f32 %v745, %v785
    %v787 = vpop.f32.mrb[0].mxu0
    %v788 = vadd.f32 %v747, %v787
    %v789 = vpop.f32.mrb[0].mxu0
    %v790 = vpop.f32.mrb[0].mxu0
    %791 = vdwg.mxu0
    %792 = vmatprep.subr.bf16.mxu0 %v566
    %793 = vmatpush1.bf16.msra.mxu0 %v565
    %794 = vmatprep.subr.bf16.mxu0 0
    %795 = vmatpush1.bf16.msra.mxu0 0
    %796 = vmatprep.subr.bf16.mxu0 0
    %797 = vmatpush1.bf16.msra.mxu0 0
    %798 = vmatprep.subr.bf16.mxu0 0
    %799 = vmatpush1.bf16.msra.mxu0 0
    %800 = vmatprep.subr.bf16.mxu0 0
    %801 = vmatpush1.bf16.msra.mxu0 0
    %802 = vmatprep.subr.bf16.mxu0 0
    %803 = vmatpush1.bf16.msra.mxu0 0
    %804 = vmatprep.subr.bf16.mxu0 0
    %805 = vmatpush1.bf16.msra.mxu0 0
    %806 = vmatprep.subr.bf16.mxu0 0
    %807 = vmatpush1.bf16.msra.mxu0 0
    %808 = vmatprep.subr.bf16.mxu0 0
    %809 = vmatpush1.bf16.msra.mxu0 0
    %810 = vmatprep.subr.bf16.mxu0 0
    %811 = vmatpush1.bf16.msra.mxu0 0
    %812 = vmatprep.subr.bf16.mxu0 0
    %813 = vmatpush1.bf16.msra.mxu0 0
    %814 = vmatprep.subr.bf16.mxu0 0
    %815 = vmatpush1.bf16.msra.mxu0 0
    %816 = vmatprep.subr.bf16.mxu0 0
    %817 = vmatpush1.bf16.msra.mxu0 0
    %818 = vmatprep.subr.bf16.mxu0 0
    %819 = vmatpush1.bf16.msra.mxu0 0
    %820 = vmatprep.subr.bf16.mxu0 0
    %821 = vmatpush1.bf16.msra.mxu0 0
    %822 = vmatprep.subr.bf16.mxu0 0
    %823 = vmatpush1.bf16.msra.mxu0 0
    %824 = vmatprep.mubr.bf16.mxu0 0
    %825 = vmatmul.mubr.bf16.gmra.mrb[0].mxu0 %v667
    %v826 = vpop.f32.mrb[0].mxu0
    %v827 = vadd.f32 %v786, %v826
    %v828 = vpop.f32.mrb[0].mxu0
    %v829 = vadd.f32 %v788, %v828
    %v830 = vpop.f32.mrb[0].mxu0
    %v831 = vpop.f32.mrb[0].mxu0
    %832 = vdwg.mxu0
    %v833 = vmax.f32 %v827, 0.0
    %v834 = vmax.f32 %v829, 0.0
    %v835 = vpack.c.bf16 %v833, %v833
    %v836 = vpack.c.bf16 %v834, %v834
    %v837 = vld [vmem:[%s4] sm:$0xf]
    %v838 = vld [vmem:[%s4 + $0x4] sm:$0xf]
    %v839 = vld [vmem:[%s4 + $0x8] sm:$0xf]
    %v840 = vld [vmem:[%s4 + $0xc] sm:$0xf]
    %v841 = vld [vmem:[%s4 + $0x10] sm:$0xf]
    %v842 = vld [vmem:[%s4 + $0x14] sm:$0xf]
    %v843 = vld [vmem:[%s4 + $0x18] sm:$0xf]
    %v844 = vld [vmem:[%s4 + $0x1c] sm:$0xf]
    %v845 = vld [vmem:[%s4 + $0x20] sm:$0xf]
    %v846 = vld [vmem:[%s4 + $0x24] sm:$0xf]
    %v847 = vld [vmem:[%s4 + $0x28] sm:$0xf]
    %v848 = vld [vmem:[%s4 + $0x2c] sm:$0xf]
    %v849 = vld [vmem:[%s4 + $0x30] sm:$0xf]
    %v850 = vld [vmem:[%s4 + $0x34] sm:$0xf]
    %v851 = vld [vmem:[%s4 + $0x38] sm:$0xf]
    %v852 = vld [vmem:[%s4 + $0x3c] sm:$0xf]
    %v853 = vld [vmem:[%s4 + $0x40] sm:$0xf]
    %v854 = vld [vmem:[%s4 + $0x44] sm:$0xf]
    %v855 = vld [vmem:[%s4 + $0x48] sm:$0xf]
    %v856 = vld [vmem:[%s4 + $0x4c] sm:$0xf]
    %v857 = vld [vmem:[%s4 + $0x50] sm:$0xf]
    %v858 = vld [vmem:[%s4 + $0x54] sm:$0xf]
    %v859 = vld [vmem:[%s4 + $0x58] sm:$0xf]
    %v860 = vld [vmem:[%s4 + $0x5c] sm:$0xf]
    %v861 = vld [vmem:[%s4 + $0x60] sm:$0xf]
    %v862 = vld [vmem:[%s4 + $0x64] sm:$0xf]
    %v863 = vld [vmem:[%s4 + $0x68] sm:$0xf]
    %v864 = vld [vmem:[%s4 + $0x6c] sm:$0xf]
    %v865 = vld [vmem:[%s4 + $0x70] sm:$0xf]
    %v866 = vld [vmem:[%s4 + $0x74] sm:$0xf]
    %v867 = vld [vmem:[%s4 + $0x78] sm:$0xf]
    %v868 = vld [vmem:[%s4 + $0x7c] sm:$0xf]
    %v869 = vld [vmem:[%s5] sm:$0x1]
    %v871 = vlaneseq
    %v872 = vshrl.u32 %v871, 7
    %v873 = vsub.s32 0, %v872
    %v874 = vrot.slane %v869, %v873
    %v908 = vunpack.c.l.b16 %v837
    %v909 = vunpack.c.l.b16 %v838
    %v910 = vunpack.c.l.b16 %v839
    %v911 = vunpack.c.l.b16 %v840
    %v912 = vunpack.c.l.b16 %v841
    %v913 = vunpack.c.l.b16 %v842
    %v914 = vunpack.c.l.b16 %v843
    %v915 = vunpack.c.l.b16 %v844
    %v916 = vunpack.c.l.b16 %v845
    %v917 = vunpack.c.l.b16 %v846
    %v918 = vunpack.c.l.b16 %v847
    %v919 = vunpack.c.l.b16 %v848
    %v920 = vunpack.c.l.b16 %v849
    %v921 = vunpack.c.l.b16 %v850
    %v922 = vunpack.c.l.b16 %v851
    %v923 = vunpack.c.l.b16 %v852
    %v924 = vunpack.c.l.b16 %v853
    %v925 = vunpack.c.l.b16 %v854
    %v926 = vunpack.c.l.b16 %v855
    %v927 = vunpack.c.l.b16 %v856
    %v928 = vunpack.c.l.b16 %v857
    %v929 = vunpack.c.l.b16 %v858
    %v930 = vunpack.c.l.b16 %v859
    %v931 = vunpack.c.l.b16 %v860
    %v932 = vunpack.c.l.b16 %v861
    %v933 = vunpack.c.l.b16 %v862
    %v934 = vunpack.c.l.b16 %v863
    %v935 = vunpack.c.l.b16 %v864
    %v936 = vunpack.c.l.b16 %v865
    %v937 = vunpack.c.l.b16 %v866
    %v938 = vunpack.c.l.b16 %v867
    %v939 = vunpack.c.l.b16 %v868
    %v940 = vpack.c.b16 %v909, %v908
    %v941 = vpack.c.b16 %v911, %v910
    %v942 = vpack.c.b16 %v913, %v912
    %v943 = vpack.c.b16 %v915, %v914
    %v944 = vpack.c.b16 %v917, %v916
    %v945 = vpack.c.b16 %v919, %v918
    %v946 = vpack.c.b16 %v921, %v920
    %v947 = vpack.c.b16 %v923, %v922
    %v948 = vpack.c.b16 %v925, %v924
    %v949 = vpack.c.b16 %v927, %v926
    %v950 = vpack.c.b16 %v929, %v928
    %v951 = vpack.c.b16 %v931, %v930
    %v952 = vpack.c.b16 %v933, %v932
    %v953 = vpack.c.b16 %v935, %v934
    %v954 = vpack.c.b16 %v937, %v936
    %v955 = vpack.c.b16 %v939, %v938
    %972 = vmatprep.subr.bf16.mxu0 0
    %973 = vmatpush1.bf16.msra.mxu0 %v940
    %974 = vmatprep.subr.bf16.mxu0 0
    %975 = vmatpush1.bf16.msra.mxu0 %v941
    %976 = vmatprep.subr.bf16.mxu0 0
    %977 = vmatpush1.bf16.msra.mxu0 %v942
    %978 = vmatprep.subr.bf16.mxu0 0
    %979 = vmatpush1.bf16.msra.mxu0 %v943
    %980 = vmatprep.subr.bf16.mxu0 0
    %981 = vmatpush1.bf16.msra.mxu0 %v944
    %982 = vmatprep.subr.bf16.mxu0 0
    %983 = vmatpush1.bf16.msra.mxu0 %v945
    %984 = vmatprep.subr.bf16.mxu0 0
    %985 = vmatpush1.bf16.msra.mxu0 %v946
    %986 = vmatprep.subr.bf16.mxu0 0
    %987 = vmatpush1.bf16.msra.mxu0 %v947
    %988 = vmatprep.subr.bf16.mxu0 0
    %989 = vmatpush1.bf16.msra.mxu0 %v948
    %990 = vmatprep.subr.bf16.mxu0 0
    %991 = vmatpush1.bf16.msra.mxu0 %v949
    %992 = vmatprep.subr.bf16.mxu0 0
    %993 = vmatpush1.bf16.msra.mxu0 %v950
    %994 = vmatprep.subr.bf16.mxu0 0
    %995 = vmatpush1.bf16.msra.mxu0 %v951
    %996 = vmatprep.subr.bf16.mxu0 0
    %997 = vmatpush1.bf16.msra.mxu0 %v952
    %998 = vmatprep.subr.bf16.mxu0 0
    %999 = vmatpush1.bf16.msra.mxu0 %v953
    %1000 = vmatprep.subr.bf16.mxu0 0
    %1001 = vmatpush1.bf16.msra.mxu0 %v954
    %1002 = vmatprep.subr.bf16.mxu0 0
    %1003 = vmatpush1.bf16.msra.mxu0 %v955
    %1004 = vmatprep.mubr.bf16.mxu0 %v836
    %1005 = vmatmul.mubr.bf16.gmra.mrb[0].mxu0 %v835
    %v1006 = vpop.f32.mrb[0].mxu0
    %v1007 = vadd.f32 %v874, %v1006
    %v1008 = vpop.f32.mrb[0].mxu0
    %v1009 = vpop.f32.mrb[0].mxu0
    %v1010 = vpop.f32.mrb[0].mxu0
    %1011 = vdwg.mxu0
    %v1012 = vmax.f32 %v1007, 0.0
    %v1013 = vpack.c.bf16 %v1012, %v1012
    %v1014 = vld [vmem:[%s6] sm:$0xf]
    %v1015 = vld [vmem:[%s6 + $0x4] sm:$0xf]
    %v1016 = vld [vmem:[%s6 + $0x8] sm:$0xf]
    %v1017 = vld [vmem:[%s6 + $0xc] sm:$0xf]
    %v1018 = vld [vmem:[%s6 + $0x10] sm:$0xf]
    %v1019 = vld [vmem:[%s6 + $0x14] sm:$0xf]
    %v1020 = vld [vmem:[%s6 + $0x18] sm:$0xf]
    %v1021 = vld [vmem:[%s6 + $0x1c] sm:$0xf]
    %v1022 = vld [vmem:[%s6 + $0x20] sm:$0xf]
    %v1023 = vld [vmem:[%s6 + $0x24] sm:$0xf]
    %v1024 = vld [vmem:[%s6 + $0x28] sm:$0xf]
    %v1025 = vld [vmem:[%s6 + $0x2c] sm:$0xf]
    %v1026 = vld [vmem:[%s6 + $0x30] sm:$0xf]
    %v1027 = vld [vmem:[%s6 + $0x34] sm:$0xf]
    %v1028 = vld [vmem:[%s6 + $0x38] sm:$0xf]
    %v1029 = vld [vmem:[%s6 + $0x3c] sm:$0xf]
    %v1030 = vld [vmem:[%s7] sm:$0x1]
    %v1032 = vlaneseq
    %v1033 = vshrl.u32 %v1032, 7
    %v1034 = vsub.s32 0, %v1033
    %v1035 = vrot.slane %v1030, %v1034
    %v1053 = vunpack.c.l.b16 %v1014
    %v1054 = vunpack.c.l.b16 %v1015
    %v1055 = vunpack.c.l.b16 %v1016
    %v1056 = vunpack.c.l.b16 %v1017
    %v1057 = vunpack.c.l.b16 %v1018
    %v1058 = vunpack.c.l.b16 %v1019
    %v1059 = vunpack.c.l.b16 %v1020
    %v1060 = vunpack.c.l.b16 %v1021
    %v1061 = vunpack.c.l.b16 %v1022
    %v1062 = vunpack.c.l.b16 %v1023
    %v1063 = vunpack.c.l.b16 %v1024
    %v1064 = vunpack.c.l.b16 %v1025
    %v1065 = vunpack.c.l.b16 %v1026
    %v1066 = vunpack.c.l.b16 %v1027
    %v1067 = vunpack.c.l.b16 %v1028
    %v1068 = vunpack.c.l.b16 %v1029
    %v1069 = vpack.c.b16 %v1054, %v1053
    %v1070 = vpack.c.b16 %v1056, %v1055
    %v1071 = vpack.c.b16 %v1058, %v1057
    %v1072 = vpack.c.b16 %v1060, %v1059
    %v1073 = vpack.c.b16 %v1062, %v1061
    %v1074 = vpack.c.b16 %v1064, %v1063
    %v1075 = vpack.c.b16 %v1066, %v1065
    %v1076 = vpack.c.b16 %v1068, %v1067
    %1085 = vmatprep.subr.bf16.mxu0 0
    %1086 = vmatpush1.bf16.msra.mxu0 %v1069
    %1087 = vmatprep.subr.bf16.mxu0 0
    %1088 = vmatpush1.bf16.msra.mxu0 %v1070
    %1089 = vmatprep.subr.bf16.mxu0 0
    %1090 = vmatpush1.bf16.msra.mxu0 %v1071
    %1091 = vmatprep.subr.bf16.mxu0 0
    %1092 = vmatpush1.bf16.msra.mxu0 %v1072
    %1093 = vmatprep.subr.bf16.mxu0 0
    %1094 = vmatpush1.bf16.msra.mxu0 %v1073
    %1095 = vmatprep.subr.bf16.mxu0 0
    %1096 = vmatpush1.bf16.msra.mxu0 %v1074
    %1097 = vmatprep.subr.bf16.mxu0 0
    %1098 = vmatpush1.bf16.msra.mxu0 %v1075
    %1099 = vmatprep.subr.bf16.mxu0 0
    %1100 = vmatpush1.bf16.msra.mxu0 %v1076
    %1101 = vmatprep.subr.bf16.mxu0 0
    %1102 = vmatpush1.bf16.msra.mxu0 0
    %1103 = vmatprep.subr.bf16.mxu0 0
    %1104 = vmatpush1.bf16.msra.mxu0 0
    %1105 = vmatprep.subr.bf16.mxu0 0
    %1106 = vmatpush1.bf16.msra.mxu0 0
    %1107 = vmatprep.subr.bf16.mxu0 0
    %1108 = vmatpush1.bf16.msra.mxu0 0
    %1109 = vmatprep.subr.bf16.mxu0 0
    %1110 = vmatpush1.bf16.msra.mxu0 0
    %1111 = vmatprep.subr.bf16.mxu0 0
    %1112 = vmatpush1.bf16.msra.mxu0 0
    %1113 = vmatprep.subr.bf16.mxu0 0
    %1114 = vmatpush1.bf16.msra.mxu0 0
    %1115 = vmatprep.subr.bf16.mxu0 0
    %1116 = vmatpush1.bf16.msra.mxu0 0
    %1117 = vmatprep.mubr.bf16.mxu0 0
    %1118 = vmatmul.mubr.bf16.gmra.mrb[0].mxu0 %v1013
    %v1119 = vpop.f32.mrb[0].mxu0
    %v1120 = vadd.f32 %v1035, %v1119
    %v1121 = vpop.f32.mrb[0].mxu0
    %v1122 = vpop.f32.mrb[0].mxu0
    %v1123 = vpop.f32.mrb[0].mxu0
    %1124 = vdwg.mxu0
    %1125 = vst [vmem:[%s15] sm:$0xff] %v1120
    %v1126 = vld [vmem:[%s1] sm:$0xff]
    %v1127 = vmul.f32 %v1120, 0.5
    %v1128 = vmul.f32 %v1127, 1.442695
    %v1129 = vpow.pop %v1128
    %1131 = vrot.lane.b32.xlu0 %v1129, 64
    %v1132 = vpop.permute.xlu0 %1131
    %v1134 = vmul.f32 %v1126, %v1132
    %v1135 = vadd.f32 %v1120, %v1134
    %v1136 = vpack.c.bf16 %v1135, %v1135
    %v1137 = vld [vmem:[%s8] sm:$0xf]
    %v1138 = vld [vmem:[%s8 + $0x4] sm:$0xf]
    %v1139 = vld [vmem:[%s8 + $0x8] sm:$0xf]
    %v1140 = vld [vmem:[%s8 + $0xc] sm:$0xf]
    %v1141 = vld [vmem:[%s8 + $0x10] sm:$0xf]
    %v1142 = vld [vmem:[%s8 + $0x14] sm:$0xf]
    %v1143 = vld [vmem:[%s8 + $0x18] sm:$0xf]
    %v1144 = vld [vmem:[%s8 + $0x1c] sm:$0xf]
    %v1145 = vld [vmem:[%s9] sm:$0x1]
    %v1147 = vlaneseq
    %v1148 = vshrl.u32 %v1147, 7
    %v1149 = vsub.s32 0, %v1148
    %v1150 = vrot.slane %v1145, %v1149
    %v1160 = vunpack.c.l.b16 %v1137
    %v1161 = vunpack.c.l.b16 %v1138
    %v1162 = vunpack.c.l.b16 %v1139
    %v1163 = vunpack.c.l.b16 %v1140
    %v1164 = vunpack.c.l.b16 %v1141
    %v1165 = vunpack.c.l.b16 %v1142
    %v1166 = vunpack.c.l.b16 %v1143
    %v1167 = vunpack.c.l.b16 %v1144
    %v1168 = vpack.c.b16 %v1161, %v1160
    %v1169 = vpack.c.b16 %v1163, %v1162
    %v1170 = vpack.c.b16 %v1165, %v1164
    %v1171 = vpack.c.b16 %v1167, %v1166
    %vm1176 = vcmask 523264
    %v1178 = vsel %vm1176, %v1136, 0
    %1180 = vmatprep.subr.bf16.mxu0 0
    %1181 = vmatpush1.bf16.msra.mxu0 %v1168
    %1182 = vmatprep.subr.bf16.mxu0 0
    %1183 = vmatpush1.bf16.msra.mxu0 %v1169
    %1184 = vmatprep.subr.bf16.mxu0 0
    %1185 = vmatpush1.bf16.msra.mxu0 %v1170
    %1186 = vmatprep.subr.bf16.mxu0 0
    %1187 = vmatpush1.bf16.msra.mxu0 %v1171
    %1188 = vmatprep.subr.bf16.mxu0 0
    %1189 = vmatpush1.bf16.msra.mxu0 0
    %1190 = vmatprep.subr.bf16.mxu0 0
    %1191 = vmatpush1.bf16.msra.mxu0 0
    %1192 = vmatprep.subr.bf16.mxu0 0
    %1193 = vmatpush1.bf16.msra.mxu0 0
    %1194 = vmatprep.subr.bf16.mxu0 0
    %1195 = vmatpush1.bf16.msra.mxu0 0
    %1196 = vmatprep.subr.bf16.mxu0 0
    %1197 = vmatpush1.bf16.msra.mxu0 0
    %1198 = vmatprep.subr.bf16.mxu0 0
    %1199 = vmatpush1.bf16.msra.mxu0 0
    %1200 = vmatprep.subr.bf16.mxu0 0
    %1201 = vmatpush1.bf16.msra.mxu0 0
    %1202 = vmatprep.subr.bf16.mxu0 0
    %1203 = vmatpush1.bf16.msra.mxu0 0
    %1204 = vmatprep.subr.bf16.mxu0 0
    %1205 = vmatpush1.bf16.msra.mxu0 0
    %1206 = vmatprep.subr.bf16.mxu0 0
    %1207 = vmatpush1.bf16.msra.mxu0 0
    %1208 = vmatprep.subr.bf16.mxu0 0
    %1209 = vmatpush1.bf16.msra.mxu0 0
    %1210 = vmatprep.subr.bf16.mxu0 0
    %1211 = vmatpush1.bf16.msra.mxu0 0
    %1212 = vmatprep.mubr.bf16.mxu0 0
    %1213 = vmatmul.mubr.bf16.gmra.mrb[0].mxu0 %v1178
    %v1214 = vpop.f32.mrb[0].mxu0
    %v1215 = vadd.f32 %v1150, %v1214
    %v1216 = vpop.f32.mrb[0].mxu0
    %v1217 = vpop.f32.mrb[0].mxu0
    %v1218 = vpop.f32.mrb[0].mxu0
    %1219 = vdwg.mxu0
    %v1220 = vmax.f32 %v1215, 0.0
    %v1221 = vpack.c.bf16 %v1220, %v1220
    %v1222 = vld [vmem:[%s10] sm:$0xff]
    %v1223 = vld [vmem:[%s10 + $0x8] sm:$0xff]
    %v1224 = vld [vmem:[%s10 + $0x10] sm:$0xff]
    %v1225 = vld [vmem:[%s10 + $0x18] sm:$0xff]
    %v1226 = vld [vmem:[%s10 + $0x20] sm:$0xff]
    %v1227 = vld [vmem:[%s10 + $0x28] sm:$0xff]
    %v1228 = vld [vmem:[%s10 + $0x30] sm:$0xff]
    %v1229 = vld [vmem:[%s10 + $0x38] sm:$0xff]
    %v1230 = vld [vmem:[%s10 + $0x40] sm:$0xff]
    %v1231 = vld [vmem:[%s10 + $0x48] sm:$0xff]
    %v1232 = vld [vmem:[%s10 + $0x50] sm:$0xff]
    %v1233 = vld [vmem:[%s10 + $0x58] sm:$0xff]
    %v1234 = vld [vmem:[%s10 + $0x60] sm:$0xff]
    %v1235 = vld [vmem:[%s10 + $0x68] sm:$0xff]
    %v1236 = vld [vmem:[%s10 + $0x70] sm:$0xff]
    %v1237 = vld [vmem:[%s10 + $0x78] sm:$0xff]
    %v1238 = vld [vmem:[%s11] sm:$0x3]
    %v1240 = vlaneseq
    %v1241 = vshrl.u32 %v1240, 7
    %v1242 = vsub.s32 0, %v1241
    %v1243 = vrot.slane %v1238, %v1242
    %v1244 = vlaneseq
    %v1245 = vshrl.u32 %v1244, 7
    %v1246 = vsub.s32 1, %v1245
    %v1247 = vrot.slane %v1238, %v1246
    %v1266 = vunpack.c.l.b16 %v1222
    %v1267 = vunpack.c.h.b16 %v1222
    %v1268 = vunpack.c.l.b16 %v1223
    %v1269 = vunpack.c.h.b16 %v1223
    %v1270 = vunpack.c.l.b16 %v1224
    %v1271 = vunpack.c.h.b16 %v1224
    %v1272 = vunpack.c.l.b16 %v1225
    %v1273 = vunpack.c.h.b16 %v1225
    %v1274 = vunpack.c.l.b16 %v1226
    %v1275 = vunpack.c.h.b16 %v1226
    %v1276 = vunpack.c.l.b16 %v1227
    %v1277 = vunpack.c.h.b16 %v1227
    %v1278 = vunpack.c.l.b16 %v1228
    %v1279 = vunpack.c.h.b16 %v1228
    %v1280 = vunpack.c.l.b16 %v1229
    %v1281 = vunpack.c.h.b16 %v1229
    %v1282 = vunpack.c.l.b16 %v1230
    %v1283 = vunpack.c.h.b16 %v1230
    %v1284 = vunpack.c.l.b16 %v1231
    %v1285 = vunpack.c.h.b16 %v1231
    %v1286 = vunpack.c.l.b16 %v1232
    %v1287 = vunpack.c.h.b16 %v1232
    %v1288 = vunpack.c.l.b16 %v1233
    %v1289 = vunpack.c.h.b16 %v1233
    %v1290 = vunpack.c.l.b16 %v1234
    %v1291 = vunpack.c.h.b16 %v1234
    %v1292 = vunpack.c.l.b16 %v1235
    %v1293 = vunpack.c.h.b16 %v1235
    %v1294 = vunpack.c.l.b16 %v1236
    %v1295 = vunpack.c.h.b16 %v1236
    %v1296 = vunpack.c.l.b16 %v1237
    %v1297 = vunpack.c.h.b16 %v1237
    %v1298 = vpack.c.b16 %v1268, %v1266
    %v1299 = vpack.c.b16 %v1269, %v1267
    %v1300 = vpack.c.b16 %v1272, %v1270
    %v1301 = vpack.c.b16 %v1273, %v1271
    %v1302 = vpack.c.b16 %v1276, %v1274
    %v1303 = vpack.c.b16 %v1277, %v1275
    %v1304 = vpack.c.b16 %v1280, %v1278
    %v1305 = vpack.c.b16 %v1281, %v1279
    %v1306 = vpack.c.b16 %v1284, %v1282
    %v1307 = vpack.c.b16 %v1285, %v1283
    %v1308 = vpack.c.b16 %v1288, %v1286
    %v1309 = vpack.c.b16 %v1289, %v1287
    %v1310 = vpack.c.b16 %v1292, %v1290
    %v1311 = vpack.c.b16 %v1293, %v1291
    %v1312 = vpack.c.b16 %v1296, %v1294
    %v1313 = vpack.c.b16 %v1297, %v1295
    %1330 = vmatprep.subr.bf16.mxu0 %v1299
    %1331 = vmatpush1.bf16.msra.mxu0 %v1298
    %1332 = vmatprep.subr.bf16.mxu0 %v1301
    %1333 = vmatpush1.bf16.msra.mxu0 %v1300
    %1334 = vmatprep.subr.bf16.mxu0 %v1303
    %1335 = vmatpush1.bf16.msra.mxu0 %v1302
    %1336 = vmatprep.subr.bf16.mxu0 %v1305
    %1337 = vmatpush1.bf16.msra.mxu0 %v1304
    %1338 = vmatprep.subr.bf16.mxu0 %v1307
    %1339 = vmatpush1.bf16.msra.mxu0 %v1306
    %1340 = vmatprep.subr.bf16.mxu0 %v1309
    %1341 = vmatpush1.bf16.msra.mxu0 %v1308
    %1342 = vmatprep.subr.bf16.mxu0 %v1311
    %1343 = vmatpush1.bf16.msra.mxu0 %v1310
    %1344 = vmatprep.subr.bf16.mxu0 %v1313
    %1345 = vmatpush1.bf16.msra.mxu0 %v1312
    %1346 = vmatprep.subr.bf16.mxu0 0
    %1347 = vmatpush1.bf16.msra.mxu0 0
    %1348 = vmatprep.subr.bf16.mxu0 0
    %1349 = vmatpush1.bf16.msra.mxu0 0
    %1350 = vmatprep.subr.bf16.mxu0 0
    %1351 = vmatpush1.bf16.msra.mxu0 0
    %1352 = vmatprep.subr.bf16.mxu0 0
    %1353 = vmatpush1.bf16.msra.mxu0 0
    %1354 = vmatprep.subr.bf16.mxu0 0
    %1355 = vmatpush1.bf16.msra.mxu0 0
    %1356 = vmatprep.subr.bf16.mxu0 0
    %1357 = vmatpush1.bf16.msra.mxu0 0
    %1358 = vmatprep.subr.bf16.mxu0 0
    %1359 = vmatpush1.bf16.msra.mxu0 0
    %1360 = vmatprep.subr.bf16.mxu0 0
    %1361 = vmatpush1.bf16.msra.mxu0 0
    %1362 = vmatprep.mubr.bf16.mxu0 0
    %1363 = vmatmul.mubr.bf16.gmra.mrb[0].mxu0 %v1221
    %v1364 = vpop.f32.mrb[0].mxu0
    %v1365 = vadd.f32 %v1243, %v1364
    %v1366 = vpop.f32.mrb[0].mxu0
    %v1367 = vadd.f32 %v1247, %v1366
    %v1368 = vpop.f32.mrb[0].mxu0
    %v1369 = vpop.f32.mrb[0].mxu0
    %1370 = vdwg.mxu0
    %v1371 = vmax.f32 %v1365, 0.0
    %v1372 = vmax.f32 %v1367, 0.0
    %v1373 = vpack.c.bf16 %v1371, %v1371
    %v1374 = vpack.c.bf16 %v1372, %v1372
    %v1375 = vld [vmem:[%s12] sm:$0xff]
    %v1376 = vld [vmem:[%s12 + $0x8] sm:$0xff]
    %v1377 = vld [vmem:[%s12 + $0x10] sm:$0xff]
    %v1378 = vld [vmem:[%s12 + $0x18] sm:$0xf]
    %v1379 = vld [vmem:[%s12 + $0x1c] sm:$0xff]
    %v1380 = vld [vmem:[%s12 + $0x24] sm:$0xff]
    %v1381 = vld [vmem:[%s12 + $0x2c] sm:$0xff]
    %v1382 = vld [vmem:[%s12 + $0x34] sm:$0xf]
    %v1383 = vld [vmem:[%s12 + $0x38] sm:$0xff]
    %v1384 = vld [vmem:[%s12 + $0x40] sm:$0xff]
    %v1385 = vld [vmem:[%s12 + $0x48] sm:$0xff]
    %v1386 = vld [vmem:[%s12 + $0x50] sm:$0xf]
    %v1387 = vld [vmem:[%s12 + $0x54] sm:$0xff]
    %v1388 = vld [vmem:[%s12 + $0x5c] sm:$0xff]
    %v1389 = vld [vmem:[%s12 + $0x64] sm:$0xff]
    %v1390 = vld [vmem:[%s12 + $0x6c] sm:$0xf]
    %v1391 = vld [vmem:[%s12 + $0x70] sm:$0xff]
    %v1392 = vld [vmem:[%s12 + $0x78] sm:$0xff]
    %v1393 = vld [vmem:[%s12 + $0x80] sm:$0xff]
    %v1394 = vld [vmem:[%s12 + $0x88] sm:$0xf]
    %v1395 = vld [vmem:[%s12 + $0x8c] sm:$0xff]
    %v1396 = vld [vmem:[%s12 + $0x94] sm:$0xff]
    %v1397 = vld [vmem:[%s12 + $0x9c] sm:$0xff]
    %v1398 = vld [vmem:[%s12 + $0xa4] sm:$0xf]
    %v1399 = vld [vmem:[%s12 + $0xa8] sm:$0xff]
    %v1400 = vld [vmem:[%s12 + $0xb0] sm:$0xff]
    %v1401 = vld [vmem:[%s12 + $0xb8] sm:$0xff]
    %v1402 = vld [vmem:[%s12 + $0xc0] sm:$0xf]
    %v1403 = vld [vmem:[%s12 + $0xc4] sm:$0xff]
    %v1404 = vld [vmem:[%s12 + $0xcc] sm:$0xff]
    %v1405 = vld [vmem:[%s12 + $0xd4] sm:$0xff]
    %v1406 = vld [vmem:[%s12 + $0xdc] sm:$0xf]
    %v1407 = vld [vmem:[%s12 + $0xe0] sm:$0xff]
    %v1408 = vld [vmem:[%s12 + $0xe8] sm:$0xff]
    %v1409 = vld [vmem:[%s12 + $0xf0] sm:$0xff]
    %v1410 = vld [vmem:[%s12 + $0xf8] sm:$0xf]
    %v1411 = vld [vmem:[%s12 + $0xfc] sm:$0xff]
    %v1412 = vld [vmem:[%s12 + $0x104] sm:$0xff]
    %v1413 = vld [vmem:[%s12 + $0x10c] sm:$0xff]
    %v1414 = vld [vmem:[%s12 + $0x114] sm:$0xf]
    %v1415 = vld [vmem:[%s12 + $0x118] sm:$0xff]
    %v1416 = vld [vmem:[%s12 + $0x120] sm:$0xff]
    %v1417 = vld [vmem:[%s12 + $0x128] sm:$0xff]
    %v1418 = vld [vmem:[%s12 + $0x130] sm:$0xf]
    %v1419 = vld [vmem:[%s12 + $0x134] sm:$0xff]
    %v1420 = vld [vmem:[%s12 + $0x13c] sm:$0xff]
    %v1421 = vld [vmem:[%s12 + $0x144] sm:$0xff]
    %v1422 = vld [vmem:[%s12 + $0x14c] sm:$0xf]
    %v1423 = vld [vmem:[%s12 + $0x150] sm:$0xff]
    %v1424 = vld [vmem:[%s12 + $0x158] sm:$0xff]
    %v1425 = vld [vmem:[%s12 + $0x160] sm:$0xff]
    %v1426 = vld [vmem:[%s12 + $0x168] sm:$0xf]
    %v1427 = vld [vmem:[%s12 + $0x16c] sm:$0xff]
    %v1428 = vld [vmem:[%s12 + $0x174] sm:$0xff]
    %v1429 = vld [vmem:[%s12 + $0x17c] sm:$0xff]
    %v1430 = vld [vmem:[%s12 + $0x184] sm:$0xf]
    %v1431 = vld [vmem:[%s12 + $0x188] sm:$0xff]
    %v1432 = vld [vmem:[%s12 + $0x190] sm:$0xff]
    %v1433 = vld [vmem:[%s12 + $0x198] sm:$0xff]
    %v1434 = vld [vmem:[%s12 + $0x1a0] sm:$0xf]
    %v1435 = vld [vmem:[%s12 + $0x1a4] sm:$0xff]
    %v1436 = vld [vmem:[%s12 + $0x1ac] sm:$0xff]
    %v1437 = vld [vmem:[%s12 + $0x1b4] sm:$0xff]
    %v1438 = vld [vmem:[%s12 + $0x1bc] sm:$0xf]
    %v1439 = vld [vmem:[%s12 + $0x1c0] sm:$0xff]
    %v1440 = vld [vmem:[%s12 + $0x1c8] sm:$0xff]
    %v1441 = vld [vmem:[%s12 + $0x1d0] sm:$0xff]
    %v1442 = vld [vmem:[%s12 + $0x1d8] sm:$0xf]
    %v1443 = vld [vmem:[%s12 + $0x1dc] sm:$0xff]
    %v1444 = vld [vmem:[%s12 + $0x1e4] sm:$0xff]
    %v1445 = vld [vmem:[%s12 + $0x1ec] sm:$0xff]
    %v1446 = vld [vmem:[%s12 + $0x1f4] sm:$0xf]
    %v1447 = vld [vmem:[%s12 + $0x1f8] sm:$0xff]
    %v1448 = vld [vmem:[%s12 + $0x200] sm:$0xff]
    %v1449 = vld [vmem:[%s12 + $0x208] sm:$0xff]
    %v1450 = vld [vmem:[%s12 + $0x210] sm:$0xf]
    %v1451 = vld [vmem:[%s12 + $0x214] sm:$0xff]
    %v1452 = vld [vmem:[%s12 + $0x21c] sm:$0xff]
    %v1453 = vld [vmem:[%s12 + $0x224] sm:$0xff]
    %v1454 = vld [vmem:[%s12 + $0x22c] sm:$0xf]
    %v1455 = vld [vmem:[%s12 + $0x230] sm:$0xff]
    %v1456 = vld [vmem:[%s12 + $0x238] sm:$0xff]
    %v1457 = vld [vmem:[%s12 + $0x240] sm:$0xff]
    %v1458 = vld [vmem:[%s12 + $0x248] sm:$0xf]
    %v1459 = vld [vmem:[%s12 + $0x24c] sm:$0xff]
    %v1460 = vld [vmem:[%s12 + $0x254] sm:$0xff]
    %v1461 = vld [vmem:[%s12 + $0x25c] sm:$0xff]
    %v1462 = vld [vmem:[%s12 + $0x264] sm:$0xf]
    %v1463 = vld [vmem:[%s12 + $0x268] sm:$0xff]
    %v1464 = vld [vmem:[%s12 + $0x270] sm:$0xff]
    %v1465 = vld [vmem:[%s12 + $0x278] sm:$0xff]
    %v1466 = vld [vmem:[%s12 + $0x280] sm:$0xf]
    %v1467 = vld [vmem:[%s12 + $0x284] sm:$0xff]
    %v1468 = vld [vmem:[%s12 + $0x28c] sm:$0xff]
    %v1469 = vld [vmem:[%s12 + $0x294] sm:$0xff]
    %v1470 = vld [vmem:[%s12 + $0x29c] sm:$0xf]
    %v1471 = vld [vmem:[%s12 + $0x2a0] sm:$0xff]
    %v1472 = vld [vmem:[%s12 + $0x2a8] sm:$0xff]
    %v1473 = vld [vmem:[%s12 + $0x2b0] sm:$0xff]
    %v1474 = vld [vmem:[%s12 + $0x2b8] sm:$0xf]
    %v1475 = vld [vmem:[%s12 + $0x2bc] sm:$0xff]
    %v1476 = vld [vmem:[%s12 + $0x2c4] sm:$0xff]
    %v1477 = vld [vmem:[%s12 + $0x2cc] sm:$0xff]
    %v1478 = vld [vmem:[%s12 + $0x2d4] sm:$0xf]
    %v1479 = vld [vmem:[%s12 + $0x2d8] sm:$0xff]
    %v1480 = vld [vmem:[%s12 + $0x2e0] sm:$0xff]
    %v1481 = vld [vmem:[%s12 + $0x2e8] sm:$0xff]
    %v1482 = vld [vmem:[%s12 + $0x2f0] sm:$0xf]
    %v1483 = vld [vmem:[%s12 + $0x2f4] sm:$0xff]
    %v1484 = vld [vmem:[%s12 + $0x2fc] sm:$0xff]
    %v1485 = vld [vmem:[%s12 + $0x304] sm:$0xff]
    %v1486 = vld [vmem:[%s12 + $0x30c] sm:$0xf]
    %v1487 = vld [vmem:[%s12 + $0x310] sm:$0xff]
    %v1488 = vld [vmem:[%s12 + $0x318] sm:$0xff]
    %v1489 = vld [vmem:[%s12 + $0x320] sm:$0xff]
    %v1490 = vld [vmem:[%s12 + $0x328] sm:$0xf]
    %v1491 = vld [vmem:[%s12 + $0x32c] sm:$0xff]
    %v1492 = vld [vmem:[%s12 + $0x334] sm:$0xff]
    %v1493 = vld [vmem:[%s12 + $0x33c] sm:$0xff]
    %v1494 = vld [vmem:[%s12 + $0x344] sm:$0xf]
    %v1495 = vld [vmem:[%s12 + $0x348] sm:$0xff]
    %v1496 = vld [vmem:[%s12 + $0x350] sm:$0xff]
    %v1497 = vld [vmem:[%s12 + $0x358] sm:$0xff]
    %v1498 = vld [vmem:[%s12 + $0x360] sm:$0xf]
    %v1499 = vld [vmem:[%s12 + $0x364] sm:$0xff]
    %v1500 = vld [vmem:[%s12 + $0x36c] sm:$0xff]
    %v1501 = vld [vmem:[%s12 + $0x374] sm:$0xff]
    %v1502 = vld [vmem:[%s12 + $0x37c] sm:$0xf]
    %v1503 = vld [vmem:[%s13] sm:$0x7f]
    %v1505 = vlaneseq
    %v1506 = vshrl.u32 %v1505, 7
    %v1507 = vsub.s32 0, %v1506
    %v1508 = vrot.slane %v1503, %v1507
    %v1509 = vlaneseq
    %v1510 = vshrl.u32 %v1509, 7
    %v1511 = vsub.s32 1, %v1510
    %v1512 = vrot.slane %v1503, %v1511
    %v1513 = vlaneseq
    %v1514 = vshrl.u32 %v1513, 7
    %v1515 = vsub.s32 2, %v1514
    %v1516 = vrot.slane %v1503, %v1515
    %v1517 = vlaneseq
    %v1518 = vshrl.u32 %v1517, 7
    %v1519 = vsub.s32 3, %v1518
    %v1520 = vrot.slane %v1503, %v1519
    %v1521 = vlaneseq
    %v1522 = vshrl.u32 %v1521, 7
    %v1523 = vsub.s32 4, %v1522
    %v1524 = vrot.slane %v1503, %v1523
    %v1525 = vlaneseq
    %v1526 = vshrl.u32 %v1525, 7
    %v1527 = vsub.s32 5, %v1526
    %v1528 = vrot.slane %v1503, %v1527
    %v1529 = vlaneseq
    %v1530 = vshrl.u32 %v1529, 7
    %v1531 = vsub.s32 6, %v1530
    %v1532 = vrot.slane %v1503, %v1531
    %v1668 = vunpack.c.l.b16 %v1375
    %v1669 = vunpack.c.h.b16 %v1375
    %v1670 = vunpack.c.l.b16 %v1376
    %v1671 = vunpack.c.h.b16 %v1376
    %v1672 = vunpack.c.l.b16 %v1377
    %v1673 = vunpack.c.h.b16 %v1377
    %v1674 = vunpack.c.l.b16 %v1378
    %v1675 = vunpack.c.l.b16 %v1379
    %v1676 = vunpack.c.h.b16 %v1379
    %v1677 = vunpack.c.l.b16 %v1380
    %v1678 = vunpack.c.h.b16 %v1380
    %v1679 = vunpack.c.l.b16 %v1381
    %v1680 = vunpack.c.h.b16 %v1381
    %v1681 = vunpack.c.l.b16 %v1382
    %v1682 = vunpack.c.l.b16 %v1383
    %v1683 = vunpack.c.h.b16 %v1383
    %v1684 = vunpack.c.l.b16 %v1384
    %v1685 = vunpack.c.h.b16 %v1384
    %v1686 = vunpack.c.l.b16 %v1385
    %v1687 = vunpack.c.h.b16 %v1385
    %v1688 = vunpack.c.l.b16 %v1386
    %v1689 = vunpack.c.l.b16 %v1387
    %v1690 = vunpack.c.h.b16 %v1387
    %v1691 = vunpack.c.l.b16 %v1388
    %v1692 = vunpack.c.h.b16 %v1388
    %v1693 = vunpack.c.l.b16 %v1389
    %v1694 = vunpack.c.h.b16 %v1389
    %v1695 = vunpack.c.l.b16 %v1390
    %v1696 = vunpack.c.l.b16 %v1391
    %v1697 = vunpack.c.h.b16 %v1391
    %v1698 = vunpack.c.l.b16 %v1392
    %v1699 = vunpack.c.h.b16 %v1392
    %v1700 = vunpack.c.l.b16 %v1393
    %v1701 = vunpack.c.h.b16 %v1393
    %v1702 = vunpack.c.l.b16 %v1394
    %v1703 = vunpack.c.l.b16 %v1395
    %v1704 = vunpack.c.h.b16 %v1395
    %v1705 = vunpack.c.l.b16 %v1396
    %v1706 = vunpack.c.h.b16 %v1396
    %v1707 = vunpack.c.l.b16 %v1397
    %v1708 = vunpack.c.h.b16 %v1397
    %v1709 = vunpack.c.l.b16 %v1398
    %v1710 = vunpack.c.l.b16 %v1399
    %v1711 = vunpack.c.h.b16 %v1399
    %v1712 = vunpack.c.l.b16 %v1400
    %v1713 = vunpack.c.h.b16 %v1400
    %v1714 = vunpack.c.l.b16 %v1401
    %v1715 = vunpack.c.h.b16 %v1401
    %v1716 = vunpack.c.l.b16 %v1402
    %v1717 = vunpack.c.l.b16 %v1403
    %v1718 = vunpack.c.h.b16 %v1403
    %v1719 = vunpack.c.l.b16 %v1404
    %v1720 = vunpack.c.h.b16 %v1404
    %v1721 = vunpack.c.l.b16 %v1405
    %v1722 = vunpack.c.h.b16 %v1405
    %v1723 = vunpack.c.l.b16 %v1406
    %v1724 = vunpack.c.l.b16 %v1407
    %v1725 = vunpack.c.h.b16 %v1407
    %v1726 = vunpack.c.l.b16 %v1408
    %v1727 = vunpack.c.h.b16 %v1408
    %v1728 = vunpack.c.l.b16 %v1409
    %v1729 = vunpack.c.h.b16 %v1409
    %v1730 = vunpack.c.l.b16 %v1410
    %v1731 = vunpack.c.l.b16 %v1411
    %v1732 = vunpack.c.h.b16 %v1411
    %v1733 = vunpack.c.l.b16 %v1412
    %v1734 = vunpack.c.h.b16 %v1412
    %v1735 = vunpack.c.l.b16 %v1413
    %v1736 = vunpack.c.h.b16 %v1413
    %v1737 = vunpack.c.l.b16 %v1414
    %v1738 = vunpack.c.l.b16 %v1415
    %v1739 = vunpack.c.h.b16 %v1415
    %v1740 = vunpack.c.l.b16 %v1416
    %v1741 = vunpack.c.h.b16 %v1416
    %v1742 = vunpack.c.l.b16 %v1417
    %v1743 = vunpack.c.h.b16 %v1417
    %v1744 = vunpack.c.l.b16 %v1418
    %v1745 = vunpack.c.l.b16 %v1419
    %v1746 = vunpack.c.h.b16 %v1419
    %v1747 = vunpack.c.l.b16 %v1420
    %v1748 = vunpack.c.h.b16 %v1420
    %v1749 = vunpack.c.l.b16 %v1421
    %v1750 = vunpack.c.h.b16 %v1421
    %v1751 = vunpack.c.l.b16 %v1422
    %v1752 = vunpack.c.l.b16 %v1423
    %v1753 = vunpack.c.h.b16 %v1423
    %v1754 = vunpack.c.l.b16 %v1424
    %v1755 = vunpack.c.h.b16 %v1424
    %v1756 = vunpack.c.l.b16 %v1425
    %v1757 = vunpack.c.h.b16 %v1425
    %v1758 = vunpack.c.l.b16 %v1426
    %v1759 = vunpack.c.l.b16 %v1427
    %v1760 = vunpack.c.h.b16 %v1427
    %v1761 = vunpack.c.l.b16 %v1428
    %v1762 = vunpack.c.h.b16 %v1428
    %v1763 = vunpack.c.l.b16 %v1429
    %v1764 = vunpack.c.h.b16 %v1429
    %v1765 = vunpack.c.l.b16 %v1430
    %v1766 = vunpack.c.l.b16 %v1431
    %v1767 = vunpack.c.h.b16 %v1431
    %v1768 = vunpack.c.l.b16 %v1432
    %v1769 = vunpack.c.h.b16 %v1432
    %v1770 = vunpack.c.l.b16 %v1433
    %v1771 = vunpack.c.h.b16 %v1433
    %v1772 = vunpack.c.l.b16 %v1434
    %v1773 = vunpack.c.l.b16 %v1435
    %v1774 = vunpack.c.h.b16 %v1435
    %v1775 = vunpack.c.l.b16 %v1436
    %v1776 = vunpack.c.h.b16 %v1436
    %v1777 = vunpack.c.l.b16 %v1437
    %v1778 = vunpack.c.h.b16 %v1437
    %v1779 = vunpack.c.l.b16 %v1438
    %v1780 = vunpack.c.l.b16 %v1439
    %v1781 = vunpack.c.h.b16 %v1439
    %v1782 = vunpack.c.l.b16 %v1440
    %v1783 = vunpack.c.h.b16 %v1440
    %v1784 = vunpack.c.l.b16 %v1441
    %v1785 = vunpack.c.h.b16 %v1441
    %v1786 = vunpack.c.l.b16 %v1442
    %v1787 = vunpack.c.l.b16 %v1443
    %v1788 = vunpack.c.h.b16 %v1443
    %v1789 = vunpack.c.l.b16 %v1444
    %v1790 = vunpack.c.h.b16 %v1444
    %v1791 = vunpack.c.l.b16 %v1445
    %v1792 = vunpack.c.h.b16 %v1445
    %v1793 = vunpack.c.l.b16 %v1446
    %v1794 = vunpack.c.l.b16 %v1447
    %v1795 = vunpack.c.h.b16 %v1447
    %v1796 = vunpack.c.l.b16 %v1448
    %v1797 = vunpack.c.h.b16 %v1448
    %v1798 = vunpack.c.l.b16 %v1449
    %v1799 = vunpack.c.h.b16 %v1449
    %v1800 = vunpack.c.l.b16 %v1450
    %v1801 = vunpack.c.l.b16 %v1451
    %v1802 = vunpack.c.h.b16 %v1451
    %v1803 = vunpack.c.l.b16 %v1452
    %v1804 = vunpack.c.h.b16 %v1452
    %v1805 = vunpack.c.l.b16 %v1453
    %v1806 = vunpack.c.h.b16 %v1453
    %v1807 = vunpack.c.l.b16 %v1454
    %v1808 = vunpack.c.l.b16 %v1455
    %v1809 = vunpack.c.h.b16 %v1455
    %v1810 = vunpack.c.l.b16 %v1456
    %v1811 = vunpack.c.h.b16 %v1456
    %v1812 = vunpack.c.l.b16 %v1457
    %v1813 = vunpack.c.h.b16 %v1457
    %v1814 = vunpack.c.l.b16 %v1458
    %v1815 = vunpack.c.l.b16 %v1459
    %v1816 = vunpack.c.h.b16 %v1459
    %v1817 = vunpack.c.l.b16 %v1460
    %v1818 = vunpack.c.h.b16 %v1460
    %v1819 = vunpack.c.l.b16 %v1461
    %v1820 = vunpack.c.h.b16 %v1461
    %v1821 = vunpack.c.l.b16 %v1462
    %v1822 = vunpack.c.l.b16 %v1463
    %v1823 = vunpack.c.h.b16 %v1463
    %v1824 = vunpack.c.l.b16 %v1464
    %v1825 = vunpack.c.h.b16 %v1464
    %v1826 = vunpack.c.l.b16 %v1465
    %v1827 = vunpack.c.h.b16 %v1465
    %v1828 = vunpack.c.l.b16 %v1466
    %v1829 = vunpack.c.l.b16 %v1467
    %v1830 = vunpack.c.h.b16 %v1467
    %v1831 = vunpack.c.l.b16 %v1468
    %v1832 = vunpack.c.h.b16 %v1468
    %v1833 = vunpack.c.l.b16 %v1469
    %v1834 = vunpack.c.h.b16 %v1469
    %v1835 = vunpack.c.l.b16 %v1470
    %v1836 = vunpack.c.l.b16 %v1471
    %v1837 = vunpack.c.h.b16 %v1471
    %v1838 = vunpack.c.l.b16 %v1472
    %v1839 = vunpack.c.h.b16 %v1472
    %v1840 = vunpack.c.l.b16 %v1473
    %v1841 = vunpack.c.h.b16 %v1473
    %v1842 = vunpack.c.l.b16 %v1474
    %v1843 = vunpack.c.l.b16 %v1475
    %v1844 = vunpack.c.h.b16 %v1475
    %v1845 = vunpack.c.l.b16 %v1476
    %v1846 = vunpack.c.h.b16 %v1476
    %v1847 = vunpack.c.l.b16 %v1477
    %v1848 = vunpack.c.h.b16 %v1477
    %v1849 = vunpack.c.l.b16 %v1478
    %v1850 = vunpack.c.l.b16 %v1479
    %v1851 = vunpack.c.h.b16 %v1479
    %v1852 = vunpack.c.l.b16 %v1480
    %v1853 = vunpack.c.h.b16 %v1480
    %v1854 = vunpack.c.l.b16 %v1481
    %v1855 = vunpack.c.h.b16 %v1481
    %v1856 = vunpack.c.l.b16 %v1482
    %v1857 = vunpack.c.l.b16 %v1483
    %v1858 = vunpack.c.h.b16 %v1483
    %v1859 = vunpack.c.l.b16 %v1484
    %v1860 = vunpack.c.h.b16 %v1484
    %v1861 = vunpack.c.l.b16 %v1485
    %v1862 = vunpack.c.h.b16 %v1485
    %v1863 = vunpack.c.l.b16 %v1486
    %v1864 = vunpack.c.l.b16 %v1487
    %v1865 = vunpack.c.h.b16 %v1487
    %v1866 = vunpack.c.l.b16 %v1488
    %v1867 = vunpack.c.h.b16 %v1488
    %v1868 = vunpack.c.l.b16 %v1489
    %v1869 = vunpack.c.h.b16 %v1489
    %v1870 = vunpack.c.l.b16 %v1490
    %v1871 = vunpack.c.l.b16 %v1491
    %v1872 = vunpack.c.h.b16 %v1491
    %v1873 = vunpack.c.l.b16 %v1492
    %v1874 = vunpack.c.h.b16 %v1492
    %v1875 = vunpack.c.l.b16 %v1493
    %v1876 = vunpack.c.h.b16 %v1493
    %v1877 = vunpack.c.l.b16 %v1494
    %v1878 = vunpack.c.l.b16 %v1495
    %v1879 = vunpack.c.h.b16 %v1495
    %v1880 = vunpack.c.l.b16 %v1496
    %v1881 = vunpack.c.h.b16 %v1496
    %v1882 = vunpack.c.l.b16 %v1497
    %v1883 = vunpack.c.h.b16 %v1497
    %v1884 = vunpack.c.l.b16 %v1498
    %v1885 = vunpack.c.l.b16 %v1499
    %v1886 = vunpack.c.h.b16 %v1499
    %v1887 = vunpack.c.l.b16 %v1500
    %v1888 = vunpack.c.h.b16 %v1500
    %v1889 = vunpack.c.l.b16 %v1501
    %v1890 = vunpack.c.h.b16 %v1501
    %v1891 = vunpack.c.l.b16 %v1502
    %v1892 = vpack.c.b16 %v1675, %v1668
    %v1893 = vpack.c.b16 %v1676, %v1669
    %v1894 = vpack.c.b16 %v1677, %v1670
    %v1895 = vpack.c.b16 %v1678, %v1671
    %v1896 = vpack.c.b16 %v1679, %v1672
    %v1897 = vpack.c.b16 %v1680, %v1673
    %v1898 = vpack.c.b16 %v1681, %v1674
    %v1899 = vpack.c.b16 %v1689, %v1682
    %v1900 = vpack.c.b16 %v1690, %v1683
    %v1901 = vpack.c.b16 %v1691, %v1684
    %v1902 = vpack.c.b16 %v1692, %v1685
    %v1903 = vpack.c.b16 %v1693, %v1686
    %v1904 = vpack.c.b16 %v1694, %v1687
    %v1905 = vpack.c.b16 %v1695, %v1688
    %v1906 = vpack.c.b16 %v1703, %v1696
    %v1907 = vpack.c.b16 %v1704, %v1697
    %v1908 = vpack.c.b16 %v1705, %v1698
    %v1909 = vpack.c.b16 %v1706, %v1699
    %v1910 = vpack.c.b16 %v1707, %v1700
    %v1911 = vpack.c.b16 %v1708, %v1701
    %v1912 = vpack.c.b16 %v1709, %v1702
    %v1913 = vpack.c.b16 %v1717, %v1710
    %v1914 = vpack.c.b16 %v1718, %v1711
    %v1915 = vpack.c.b16 %v1719, %v1712
    %v1916 = vpack.c.b16 %v1720, %v1713
    %v1917 = vpack.c.b16 %v1721, %v1714
    %v1918 = vpack.c.b16 %v1722, %v1715
    %v1919 = vpack.c.b16 %v1723, %v1716
    %v1920 = vpack.c.b16 %v1731, %v1724
    %v1921 = vpack.c.b16 %v1732, %v1725
    %v1922 = vpack.c.b16 %v1733, %v1726
    %v1923 = vpack.c.b16 %v1734, %v1727
    %v1924 = vpack.c.b16 %v1735, %v1728
    %v1925 = vpack.c.b16 %v1736, %v1729
    %v1926 = vpack.c.b16 %v1737, %v1730
    %v1927 = vpack.c.b16 %v1745, %v1738
    %v1928 = vpack.c.b16 %v1746, %v1739
    %v1929 = vpack.c.b16 %v1747, %v1740
    %v1930 = vpack.c.b16 %v1748, %v1741
    %v1931 = vpack.c.b16 %v1749, %v1742
    %v1932 = vpack.c.b16 %v1750, %v1743
    %v1933 = vpack.c.b16 %v1751, %v1744
    %v1934 = vpack.c.b16 %v1759, %v1752
    %v1935 = vpack.c.b16 %v1760, %v1753
    %v1936 = vpack.c.b16 %v1761, %v1754
    %v1937 = vpack.c.b16 %v1762, %v1755
    %v1938 = vpack.c.b16 %v1763, %v1756
    %v1939 = vpack.c.b16 %v1764, %v1757
    %v1940 = vpack.c.b16 %v1765, %v1758
    %v1941 = vpack.c.b16 %v1773, %v1766
    %v1942 = vpack.c.b16 %v1774, %v1767
    %v1943 = vpack.c.b16 %v1775, %v1768
    %v1944 = vpack.c.b16 %v1776, %v1769
    %v1945 = vpack.c.b16 %v1777, %v1770
    %v1946 = vpack.c.b16 %v1778, %v1771
    %v1947 = vpack.c.b16 %v1779, %v1772
    %v1948 = vpack.c.b16 %v1787, %v1780
    %v1949 = vpack.c.b16 %v1788, %v1781
    %v1950 = vpack.c.b16 %v1789, %v1782
    %v1951 = vpack.c.b16 %v1790, %v1783
    %v1952 = vpack.c.b16 %v1791, %v1784
    %v1953 = vpack.c.b16 %v1792, %v1785
    %v1954 = vpack.c.b16 %v1793, %v1786
    %v1955 = vpack.c.b16 %v1801, %v1794
    %v1956 = vpack.c.b16 %v1802, %v1795
    %v1957 = vpack.c.b16 %v1803, %v1796
    %v1958 = vpack.c.b16 %v1804, %v1797
    %v1959 = vpack.c.b16 %v1805, %v1798
    %v1960 = vpack.c.b16 %v1806, %v1799
    %v1961 = vpack.c.b16 %v1807, %v1800
    %v1962 = vpack.c.b16 %v1815, %v1808
    %v1963 = vpack.c.b16 %v1816, %v1809
    %v1964 = vpack.c.b16 %v1817, %v1810
    %v1965 = vpack.c.b16 %v1818, %v1811
    %v1966 = vpack.c.b16 %v1819, %v1812
    %v1967 = vpack.c.b16 %v1820, %v1813
    %v1968 = vpack.c.b16 %v1821, %v1814
    %v1969 = vpack.c.b16 %v1829, %v1822
    %v1970 = vpack.c.b16 %v1830, %v1823
    %v1971 = vpack.c.b16 %v1831, %v1824
    %v1972 = vpack.c.b16 %v1832, %v1825
    %v1973 = vpack.c.b16 %v1833, %v1826
    %v1974 = vpack.c.b16 %v1834, %v1827
    %v1975 = vpack.c.b16 %v1835, %v1828
    %v1976 = vpack.c.b16 %v1843, %v1836
    %v1977 = vpack.c.b16 %v1844, %v1837
    %v1978 = vpack.c.b16 %v1845, %v1838
    %v1979 = vpack.c.b16 %v1846, %v1839
    %v1980 = vpack.c.b16 %v1847, %v1840
    %v1981 = vpack.c.b16 %v1848, %v1841
    %v1982 = vpack.c.b16 %v1849, %v1842
    %v1983 = vpack.c.b16 %v1857, %v1850
    %v1984 = vpack.c.b16 %v1858, %v1851
    %v1985 = vpack.c.b16 %v1859, %v1852
    %v1986 = vpack.c.b16 %v1860, %v1853
    %v1987 = vpack.c.b16 %v1861, %v1854
    %v1988 = vpack.c.b16 %v1862, %v1855
    %v1989 = vpack.c.b16 %v1863, %v1856
    %v1990 = vpack.c.b16 %v1871, %v1864
    %v1991 = vpack.c.b16 %v1872, %v1865
    %v1992 = vpack.c.b16 %v1873, %v1866
    %v1993 = vpack.c.b16 %v1874, %v1867
    %v1994 = vpack.c.b16 %v1875, %v1868
    %v1995 = vpack.c.b16 %v1876, %v1869
    %v1996 = vpack.c.b16 %v1877, %v1870
    %v1997 = vpack.c.b16 %v1885, %v1878
    %v1998 = vpack.c.b16 %v1886, %v1879
    %v1999 = vpack.c.b16 %v1887, %v1880
    %v2000 = vpack.c.b16 %v1888, %v1881
    %v2001 = vpack.c.b16 %v1889, %v1882
    %v2002 = vpack.c.b16 %v1890, %v1883
    %v2003 = vpack.c.b16 %v1891, %v1884
    %2116 = vmatprep.subr.bf16.mxu0 %v1893
    %2117 = vmatpush1.bf16.msra.mxu0 %v1892
    %2118 = vmatprep.subr.bf16.mxu0 %v1900
    %2119 = vmatpush1.bf16.msra.mxu0 %v1899
    %2120 = vmatprep.subr.bf16.mxu0 %v1907
    %2121 = vmatpush1.bf16.msra.mxu0 %v1906
    %2122 = vmatprep.subr.bf16.mxu0 %v1914
    %2123 = vmatpush1.bf16.msra.mxu0 %v1913
    %2124 = vmatprep.subr.bf16.mxu0 %v1921
    %2125 = vmatpush1.bf16.msra.mxu0 %v1920
    %2126 = vmatprep.subr.bf16.mxu0 %v1928
    %2127 = vmatpush1.bf16.msra.mxu0 %v1927
    %2128 = vmatprep.subr.bf16.mxu0 %v1935
    %2129 = vmatpush1.bf16.msra.mxu0 %v1934
    %2130 = vmatprep.subr.bf16.mxu0 %v1942
    %2131 = vmatpush1.bf16.msra.mxu0 %v1941
    %2132 = vmatprep.subr.bf16.mxu0 %v1949
    %2133 = vmatpush1.bf16.msra.mxu0 %v1948
    %2134 = vmatprep.subr.bf16.mxu0 %v1956
    %2135 = vmatpush1.bf16.msra.mxu0 %v1955
    %2136 = vmatprep.subr.bf16.mxu0 %v1963
    %2137 = vmatpush1.bf16.msra.mxu0 %v1962
    %2138 = vmatprep.subr.bf16.mxu0 %v1970
    %2139 = vmatpush1.bf16.msra.mxu0 %v1969
    %2140 = vmatprep.subr.bf16.mxu0 %v1977
    %2141 = vmatpush1.bf16.msra.mxu0 %v1976
    %2142 = vmatprep.subr.bf16.mxu0 %v1984
    %2143 = vmatpush1.bf16.msra.mxu0 %v1983
    %2144 = vmatprep.subr.bf16.mxu0 %v1991
    %2145 = vmatpush1.bf16.msra.mxu0 %v1990
    %2146 = vmatprep.subr.bf16.mxu0 %v1998
    %2147 = vmatpush1.bf16.msra.mxu0 %v1997
    %2148 = vmatprep.mubr.bf16.mxu0 %v1374
    %2149 = vmatmul.mubr.bf16.gmra.mrb[0].mxu0 %v1373
    %v2150 = vpop.f32.mrb[0].mxu0
    %v2151 = vadd.f32 %v1508, %v2150
    %v2152 = vpop.f32.mrb[0].mxu0
    %v2153 = vadd.f32 %v1512, %v2152
    %v2154 = vpop.f32.mrb[0].mxu0
    %v2155 = vpop.f32.mrb[0].mxu0
    %2156 = vdwg.mxu0
    %2157 = vmatprep.subr.bf16.mxu0 %v1895
    %2158 = vmatpush1.bf16.msra.mxu0 %v1894
    %2159 = vmatprep.subr.bf16.mxu0 %v1902
    %2160 = vmatpush1.bf16.msra.mxu0 %v1901
    %2161 = vmatprep.subr.bf16.mxu0 %v1909
    %2162 = vmatpush1.bf16.msra.mxu0 %v1908
    %2163 = vmatprep.subr.bf16.mxu0 %v1916
    %2164 = vmatpush1.bf16.msra.mxu0 %v1915
    %2165 = vmatprep.subr.bf16.mxu0 %v1923
    %2166 = vmatpush1.bf16.msra.mxu0 %v1922
    %2167 = vmatprep.subr.bf16.mxu0 %v1930
    %2168 = vmatpush1.bf16.msra.mxu0 %v1929
    %2169 = vmatprep.subr.bf16.mxu0 %v1937
    %2170 = vmatpush1.bf16.msra.mxu0 %v1936
    %2171 = vmatprep.subr.bf16.mxu0 %v1944
    %2172 = vmatpush1.bf16.msra.mxu0 %v1943
    %2173 = vmatprep.subr.bf16.mxu0 %v1951
    %2174 = vmatpush1.bf16.msra.mxu0 %v1950
    %2175 = vmatprep.subr.bf16.mxu0 %v1958
    %2176 = vmatpush1.bf16.msra.mxu0 %v1957
    %2177 = vmatprep.subr.bf16.mxu0 %v1965
    %2178 = vmatpush1.bf16.msra.mxu0 %v1964
    %2179 = vmatprep.subr.bf16.mxu0 %v1972
    %2180 = vmatpush1.bf16.msra.mxu0 %v1971
    %2181 = vmatprep.subr.bf16.mxu0 %v1979
    %2182 = vmatpush1.bf16.msra.mxu0 %v1978
    %2183 = vmatprep.subr.bf16.mxu0 %v1986
    %2184 = vmatpush1.bf16.msra.mxu0 %v1985
    %2185 = vmatprep.subr.bf16.mxu0 %v1993
    %2186 = vmatpush1.bf16.msra.mxu0 %v1992
    %2187 = vmatprep.subr.bf16.mxu0 %v2000
    %2188 = vmatpush1.bf16.msra.mxu0 %v1999
    %2189 = vmatprep.mubr.bf16.mxu0 %v1374
    %2190 = vmatmul.mubr.bf16.gmra.mrb[0].mxu0 %v1373
    %v2191 = vpop.f32.mrb[0].mxu0
    %v2192 = vadd.f32 %v1516, %v2191
    %v2193 = vpop.f32.mrb[0].mxu0
    %v2194 = vadd.f32 %v1520, %v2193
    %v2195 = vpop.f32.mrb[0].mxu0
    %v2196 = vpop.f32.mrb[0].mxu0
    %2197 = vdwg.mxu0
    %2198 = vmatprep.subr.bf16.mxu0 %v1897
    %2199 = vmatpush1.bf16.msra.mxu0 %v1896
    %2200 = vmatprep.subr.bf16.mxu0 %v1904
    %2201 = vmatpush1.bf16.msra.mxu0 %v1903
    %2202 = vmatprep.subr.bf16.mxu0 %v1911
    %2203 = vmatpush1.bf16.msra.mxu0 %v1910
    %2204 = vmatprep.subr.bf16.mxu0 %v1918
    %2205 = vmatpush1.bf16.msra.mxu0 %v1917
    %2206 = vmatprep.subr.bf16.mxu0 %v1925
    %2207 = vmatpush1.bf16.msra.mxu0 %v1924
    %2208 = vmatprep.subr.bf16.mxu0 %v1932
    %2209 = vmatpush1.bf16.msra.mxu0 %v1931
    %2210 = vmatprep.subr.bf16.mxu0 %v1939
    %2211 = vmatpush1.bf16.msra.mxu0 %v1938
    %2212 = vmatprep.subr.bf16.mxu0 %v1946
    %2213 = vmatpush1.bf16.msra.mxu0 %v1945
    %2214 = vmatprep.subr.bf16.mxu0 %v1953
    %2215 = vmatpush1.bf16.msra.mxu0 %v1952
    %2216 = vmatprep.subr.bf16.mxu0 %v1960
    %2217 = vmatpush1.bf16.msra.mxu0 %v1959
    %2218 = vmatprep.subr.bf16.mxu0 %v1967
    %2219 = vmatpush1.bf16.msra.mxu0 %v1966
    %2220 = vmatprep.subr.bf16.mxu0 %v1974
    %2221 = vmatpush1.bf16.msra.mxu0 %v1973
    %2222 = vmatprep.subr.bf16.mxu0 %v1981
    %2223 = vmatpush1.bf16.msra.mxu0 %v1980
    %2224 = vmatprep.subr.bf16.mxu0 %v1988
    %2225 = vmatpush1.bf16.msra.mxu0 %v1987
    %2226 = vmatprep.subr.bf16.mxu0 %v1995
    %2227 = vmatpush1.bf16.msra.mxu0 %v1994
    %2228 = vmatprep.subr.bf16.mxu0 %v2002
    %2229 = vmatpush1.bf16.msra.mxu0 %v2001
    %2230 = vmatprep.mubr.bf16.mxu0 %v1374
    %2231 = vmatmul.mubr.bf16.gmra.mrb[0].mxu0 %v1373
    %v2232 = vpop.f32.mrb[0].mxu0
    %v2233 = vadd.f32 %v1524, %v2232
    %v2234 = vpop.f32.mrb[0].mxu0
    %v2235 = vadd.f32 %v1528, %v2234
    %v2236 = vpop.f32.mrb[0].mxu0
    %v2237 = vpop.f32.mrb[0].mxu0
    %2238 = vdwg.mxu0
    %2239 = vmatprep.subr.bf16.mxu0 0
    %2240 = vmatpush1.bf16.msra.mxu0 %v1898
    %2241 = vmatprep.subr.bf16.mxu0 0
    %2242 = vmatpush1.bf16.msra.mxu0 %v1905
    %2243 = vmatprep.subr.bf16.mxu0 0
    %2244 = vmatpush1.bf16.msra.mxu0 %v1912
    %2245 = vmatprep.subr.bf16.mxu0 0
    %2246 = vmatpush1.bf16.msra.mxu0 %v1919
    %2247 = vmatprep.subr.bf16.mxu0 0
    %2248 = vmatpush1.bf16.msra.mxu0 %v1926
    %2249 = vmatprep.subr.bf16.mxu0 0
    %2250 = vmatpush1.bf16.msra.mxu0 %v1933
    %2251 = vmatprep.subr.bf16.mxu0 0
    %2252 = vmatpush1.bf16.msra.mxu0 %v1940
    %2253 = vmatprep.subr.bf16.mxu0 0
    %2254 = vmatpush1.bf16.msra.mxu0 %v1947
    %2255 = vmatprep.subr.bf16.mxu0 0
    %2256 = vmatpush1.bf16.msra.mxu0 %v1954
    %2257 = vmatprep.subr.bf16.mxu0 0
    %2258 = vmatpush1.bf16.msra.mxu0 %v1961
    %2259 = vmatprep.subr.bf16.mxu0 0
    %2260 = vmatpush1.bf16.msra.mxu0 %v1968
    %2261 = vmatprep.subr.bf16.mxu0 0
    %2262 = vmatpush1.bf16.msra.mxu0 %v1975
    %2263 = vmatprep.subr.bf16.mxu0 0
    %2264 = vmatpush1.bf16.msra.mxu0 %v1982
    %2265 = vmatprep.subr.bf16.mxu0 0
    %2266 = vmatpush1.bf16.msra.mxu0 %v1989
    %2267 = vmatprep.subr.bf16.mxu0 0
    %2268 = vmatpush1.bf16.msra.mxu0 %v1996
    %2269 = vmatprep.subr.bf16.mxu0 0
    %2270 = vmatpush1.bf16.msra.mxu0 %v2003
    %2271 = vmatprep.mubr.bf16.mxu0 %v1374
    %2272 = vmatmul.mubr.bf16.gmra.mrb[0].mxu0 %v1373
    %v2273 = vpop.f32.mrb[0].mxu0
    %v2274 = vadd.f32 %v1532, %v2273
    %v2275 = vpop.f32.mrb[0].mxu0
    %v2276 = vpop.f32.mrb[0].mxu0
    %v2277 = vpop.f32.mrb[0].mxu0
    %2278 = vdwg.mxu0
    %v2279 = vsub.f32 0.0, %v2151
    %v2280 = vsub.f32 0.0, %v2153
    %v2281 = vsub.f32 0.0, %v2192
    %v2282 = vsub.f32 0.0, %v2194
    %v2283 = vsub.f32 0.0, %v2233
    %v2284 = vsub.f32 0.0, %v2235
    %v2285 = vsub.f32 0.0, %v2274
    %v2286 = vmul.f32 %v2279, 1.442695
    %v2287 = vpow.pop %v2286
    %v2288 = vmul.f32 %v2280, 1.442695
    %v2289 = vpow.pop %v2288
    %v2290 = vmul.f32 %v2281, 1.442695
    %v2291 = vpow.pop %v2290
    %v2292 = vmul.f32 %v2282, 1.442695
    %v2293 = vpow.pop %v2292
    %v2294 = vmul.f32 %v2283, 1.442695
    %v2295 = vpow.pop %v2294
    %v2296 = vmul.f32 %v2284, 1.442695
    %v2297 = vpow.pop %v2296
    %v2298 = vmul.f32 %v2285, 1.442695
    %v2299 = vpow.pop %v2298
    %v2300 = vadd.f32 %v2287, 1.0
    %v2301 = vadd.f32 %v2289, 1.0
    %v2302 = vadd.f32 %v2291, 1.0
    %v2303 = vadd.f32 %v2293, 1.0
    %v2304 = vadd.f32 %v2295, 1.0
    %v2305 = vadd.f32 %v2297, 1.0
    %v2306 = vadd.f32 %v2299, 1.0
    %v2307 = vrcp.pop %v2300
    %v2308 = vrcp.pop %v2301
    %v2309 = vrcp.pop %v2302
    %v2310 = vrcp.pop %v2303
    %v2311 = vrcp.pop %v2304
    %v2312 = vrcp.pop %v2305
    %v2313 = vrcp.pop %v2306
    %v2314 = vmin.f32 %v2307, 1.0
    %v2315 = vmin.f32 %v2308, 1.0
    %v2316 = vmin.f32 %v2309, 1.0
    %v2317 = vmin.f32 %v2310, 1.0
    %v2318 = vmin.f32 %v2311, 1.0
    %v2319 = vmin.f32 %v2312, 1.0
    %v2320 = vmin.f32 %v2313, 1.0
    %v2321 = vpack.c.bf16 %v2314, %v2314
    %v2322 = vpack.c.bf16 %v2315, %v2315
    %v2323 = vpack.c.bf16 %v2316, %v2316
    %v2324 = vpack.c.bf16 %v2317, %v2317
    %v2325 = vpack.c.bf16 %v2318, %v2318
    %v2326 = vpack.c.bf16 %v2319, %v2319
    %v2327 = vpack.c.bf16 %v2320, %v2320
    %v2335 = vunpack.c.l.b16 %v2321
    %v2336 = vunpack.c.l.b16 %v2322
    %v2337 = vunpack.c.l.b16 %v2323
    %v2338 = vunpack.c.l.b16 %v2324
    %v2339 = vunpack.c.l.b16 %v2325
    %v2340 = vunpack.c.l.b16 %v2326
    %v2341 = vunpack.c.l.b16 %v2327
    %v2342 = vpack.c.b16 %v2336, %v2335
    %v2343 = vpack.c.b16 %v2338, %v2337
    %v2344 = vpack.c.b16 %v2340, %v2339
    %v2345 = vpack.c.b16 %v2341, %v2341
    %2350 = vst [vmem:[#allocation2] sm:$0xff] %v2342
    %2351 = vst [vmem:[#allocation2 + $0x8] sm:$0xff] %v2343
    %2352 = vst [vmem:[#allocation2 + $0x10] sm:$0xff] %v2344
    %vm2353 = vcmask 125952
    %2354 = vst.msk [vmem:[#allocation2 + $0x18] sm:$0xf] %vm2353, %v2345
    // Predicated region
    $region58: #{vae_forward.1} parent=1 // pred_check
      _
    $region59: #{vae_forward.1} parent=1 // pred_check_branch
      %2356 = sbr.rel (0) target = $region61
    $region60: #{vae_forward.1} parent=1 // pred_region
      %s2358 = ssub.s32 448, 448
      %2359 = vsyncadd [#allocation3], %s2358
      %s2361 = sshll.u32 [#allocation2], 4
      %s2362 = int_to_ptr.vmem [resolvable:$true] %s2361
      %2364 = dma.vmem_to_hbm [thread:$0]  %s2362, 448, %s14, [#allocation3]
    $region61: #{vae_forward.1} parent=1 // pred_fallthru
      _
    // Predicated region
    $region62: #{vae_forward.1} parent=1 // pred_check
      _
    $region63: #{vae_forward.1} parent=1 // pred_check_branch
      %2366 = sbr.rel (0) target = $region65
    $region64: #{vae_forward.1} parent=1 // pred_region
      _
    $region65: #{vae_forward.1} parent=1 // pred_fallthru
      _
    // Predicated region
    $region66: #{vae_forward.1} parent=1 // pred_check
      _
    $region67: #{vae_forward.1} parent=1 // pred_check_branch
      %2368 = sbr.rel (0) target = $region69
    $region68: #{vae_forward.1} parent=1 // pred_region
      %2369 = dma.done [#allocation3], 448
    $region69: #{vae_forward.1} parent=1 // pred_fallthru
      _
    // Predicated region
    $region70: #{vae_forward.1} parent=1 // pred_check
      _
    $region71: #{vae_forward.1} parent=1 // pred_check_branch
      %2371 = sbr.rel (0) target = $region73
    $region72: #{vae_forward.1} parent=1 // pred_region
      _
    $region73: #{vae_forward.1} parent=1 // pred_fallthru
      _
    %2372 = vsyncpa [#allocation3], 1

</llo_original>
